<compile_context>
chip_gen: v7x
topology: tpu7x:2x2x1
jax: 0.10.0
libtpu: 0.0.40
codegen_flags: <defaults>
</compile_context>

<pallas_src>
import functools

import numpy as np

import jax
import jax.numpy as jnp
from jax.experimental import pallas as pl
from jax.experimental.pallas import tpu as pltpu


def bottleneck_kernel(x_ref, xh_ref, w1_ref, b1_ref, w2_ref, b2_ref, w3_ref,
                      b3_ref, out_ref, xs_ref, *, W, TH):
    # x_ref : (1, TH*W, Cin)   bf16, one row-band of one image
    # xh_ref: (1, 1, 2*W, Cin) bf16, image row above / below the band (zeros
    #                          at the image edges)
    # w1_ref: (Cin, P) bf16 (BN1 scale folded);  b1_ref: (1, P) f32
    # w2_ref: (3, 3P, P) bf16, [kh, kw*P + ci, co] (BN2 scale folded)
    # w3_ref: (P, Cout) bf16 (BN3 scale folded);  b3_ref: (1, Cout) f32
    # xs_ref: ((TH+2)*W, 3P) bf16 scratch; row s = image row band_start-1+s//W,
    #         lane slot kw holds y1[row, w + kw - 1] (zero outside the row).
    THW = TH * W
    P = w1_ref.shape[1]
    b = pl.program_id(1)
    nb = pl.num_programs(1)

    x = x_ref[0]            # (THW, Cin) bf16
    xh = xh_ref[0, 0]       # (2W, Cin)  bf16

    # ---- conv1 (1x1) + folded-BN bias + relu (band rows + 2 halo rows) ----
    y1 = jnp.maximum(
        jnp.dot(x, w1_ref[...], preferred_element_type=jnp.float32) + b1_ref[...],
        0.0)                                                  # (THW, P) f32
    y1h = jnp.maximum(
        jnp.dot(xh, w1_ref[...], preferred_element_type=jnp.float32) + b1_ref[...],
        0.0)                                                  # (2W, P) f32
    # Halo rows outside the image must be zero after conv1 (conv2 zero-pads
    # its own input), not relu(bias): scalar keep-factor per band.
    top = y1h[0:W] * (b > 0).astype(jnp.float32)              # row above band
    bot = y1h[W:2 * W] * (b + 1 < nb).astype(jnp.float32)     # row below band

    # ---- stage the three kw-shifted copies of y1 side by side (K = 3P) ----
    def stage(y, off):
        n = y.shape[0]
        wcol = jax.lax.broadcasted_iota(jnp.int32, (n, 1), 0) % W
        left = jnp.where(wcol > 0, jnp.roll(y, 1, axis=0), 0.0)        # y[., w-1]
        right = jnp.where(wcol < W - 1, jnp.roll(y, -1, axis=0), 0.0)  # y[., w+1]
        xs_ref[off:off + n, 0:P] = left.astype(jnp.bfloat16)
        xs_ref[off:off + n, P:2 * P] = y.astype(jnp.bfloat16)
        xs_ref[off:off + n, 2 * P:3 * P] = right.astype(jnp.bfloat16)

    stage(top, 0)                       # top halo row
    stage(y1, W)                        # band rows
    stage(bot, (TH + 1) * W)            # bottom halo row

    # ---- conv2 (3x3, pad=1) as 3 matmuls with K = 3P, + bias + relu ----
    acc = jnp.dot(xs_ref[0:THW, :], w2_ref[0], preferred_element_type=jnp.float32)
    acc += jnp.dot(xs_ref[W:W + THW, :], w2_ref[1], preferred_element_type=jnp.float32)
    acc += jnp.dot(xs_ref[2 * W:2 * W + THW, :], w2_ref[2],
                   preferred_element_type=jnp.float32)
    y2 = jnp.maximum(acc + b2_ref[...], 0.0)                  # (THW, P) f32

    # ---- conv3 (1x1) + folded-BN bias, identity residual, relu ----
    y3 = jnp.dot(y2.astype(jnp.bfloat16), w3_ref[...],
                 preferred_element_type=jnp.float32) + b3_ref[...]
    out = jnp.maximum(y3 + x.astype(jnp.float32), 0.0)
    out_ref[0] = out.astype(out_ref.dtype)


def bottleneck_forward(x_nchw, kernel_params, *, band_rows=None):
    """x_nchw: (N, Cin, H, W) float32, PyTorch layout.  Returns NCHW float32."""
    w1, b1, w2f, b2, w3, b3 = kernel_params
    N, Cin, H, W = x_nchw.shape
    Cin_p, P = w1.shape
    Cout_p = w3.shape[1]
    assert Cin_p == Cout_p, "identity residual requires inplanes == planes * 4"

    # Row-band height: largest divisor of H with <= ~512 flattened rows/band.
    if band_rows is None:
        divisors = [d for d in range(1, H + 1) if H % d == 0]
        fitting = [d for d in divisors if d * W <= 512]
        band_rows = max(fitting) if fitting else 1
    TH = band_rows
    assert H % TH == 0, "band_rows must divide H"
    nb = H // TH
    HW = H * W

    x = jnp.transpose(x_nchw, (0, 2, 3, 1))                   # (N, H, W, Cin)
    if Cin_p > Cin:
        x = jnp.pad(x, ((0, 0), (0, 0), (0, 0), (0, Cin_p - Cin)))  # lane-dense
    x = x.astype(jnp.bfloat16)                                 # halve HBM traffic
    x_flat = x.reshape(N, HW, Cin_p)

    # Tiny per-band halo side input (1 image row above + 1 below each band,
    # zeros at the image edges): keeps the main x blocks non-overlapping so
    # both grid axes stay fully parallel.
    xp = jnp.pad(x, ((0, 0), (1, 1), (0, 0), (0, 0)))          # (N, H+2, W, C)
    band = np.arange(nb)
    x_halo = jnp.stack([xp[:, band * TH], xp[:, band * TH + TH + 1]], axis=2)
    x_halo = x_halo.reshape(N, nb, 2 * W, Cin_p)

    out = pl.pallas_call(
        functools.partial(bottleneck_kernel, W=W, TH=TH),
        out_shape=jax.ShapeDtypeStruct((N, HW, Cout_p), jnp.float32),
        grid_spec=pltpu.PrefetchScalarGridSpec(
            num_scalar_prefetch=0,
            grid=(N, nb),
            in_specs=[
                pl.BlockSpec((1, TH * W, Cin_p), lambda n, b: (n, b, 0)),
                pl.BlockSpec((1, 1, 2 * W, Cin_p), lambda n, b: (n, b, 0, 0)),
                pl.BlockSpec((Cin_p, P), lambda n, b: (0, 0)),
                pl.BlockSpec((1, P), lambda n, b: (0, 0)),
                pl.BlockSpec((3, 3 * P, P), lambda n, b: (0, 0, 0)),
                pl.BlockSpec((1, P), lambda n, b: (0, 0)),
                pl.BlockSpec((P, Cout_p), lambda n, b: (0, 0)),
                pl.BlockSpec((1, Cout_p), lambda n, b: (0, 0)),
            ],
            out_specs=pl.BlockSpec((1, TH * W, Cout_p), lambda n, b: (n, b, 0)),
            scratch_shapes=[pltpu.VMEM(((TH + 2) * W, 3 * P), jnp.bfloat16)],
        ),
        compiler_params=pltpu.CompilerParams(
            dimension_semantics=("parallel", "parallel"),
            vmem_limit_bytes=32 * 1024 * 1024,
        ),
    )(x_flat, x_halo, w1, b1, w2f, b2, w3, b3)

    out = out[:, :, :Cin].reshape(N, H, W, Cin)
    return jnp.transpose(out, (0, 3, 1, 2))                    # back to NCHW


def _pad128(c):
    return -(-c // 128) * 128


def init_params(key, inplanes, planes):
    """Deterministic synthetic parameters with the shapes Bottleneck.__init__ implies."""
    expansion = 4
    outplanes = planes * expansion
    eps = 1e-5
    ks = jax.random.split(key, 15)

    # PyTorch conv weight shapes: (O, I, kH, kW), bias=False everywhere.
    conv1_w = jax.random.normal(ks[0], (planes, inplanes, 1, 1), jnp.float32) * 0.1
    conv2_w = jax.random.normal(ks[1], (planes, planes, 3, 3), jnp.float32) * 0.1
    conv3_w = jax.random.normal(ks[2], (outplanes, planes, 1, 1), jnp.float32) * 0.1

    def bn_fold(kg, kb, km, kv, c):
        gamma = jax.random.uniform(kg, (c,), jnp.float32, 0.5, 1.5)
        beta = jax.random.normal(kb, (c,), jnp.float32) * 0.1
        mean = jax.random.normal(km, (c,), jnp.float32) * 0.1
        var = jax.random.uniform(kv, (c,), jnp.float32, 0.5, 1.5)
        scale = gamma / jnp.sqrt(var + eps)
        bias = beta - mean * scale
        return scale, bias

    s1, b1 = bn_fold(ks[3], ks[4], ks[5], ks[6], planes)
    s2, b2 = bn_fold(ks[7], ks[8], ks[9], ks[10], planes)
    s3, b3 = bn_fold(ks[11], ks[12], ks[13], ks[14], outplanes)

    # Kernel-layout params: fold BN scale into weights, pad channels to a
    # multiple of 128 (lane-dense), store weights bf16, biases f32.
    Cin_p, P_p, Cout_p = _pad128(inplanes), _pad128(planes), _pad128(outplanes)

    w1 = conv1_w[:, :, 0, 0].T * s1[None, :]                   # (Cin, P)
    w1 = jnp.pad(w1, ((0, Cin_p - inplanes), (0, P_p - planes))).astype(jnp.bfloat16)

    w2 = jnp.transpose(conv2_w, (2, 3, 1, 0)) * s2[None, None, None, :]  # (3,3,Ci,Co)
    w2 = jnp.pad(w2, ((0, 0), (0, 0), (0, P_p - planes), (0, P_p - planes)))
    w2f = w2.reshape(3, 3 * P_p, P_p).astype(jnp.bfloat16)     # [kh, kw*P + ci, co]

    w3 = conv3_w[:, :, 0, 0].T * s3[None, :]                   # (P, Cout)
    w3 = jnp.pad(w3, ((0, P_p - planes), (0, Cout_p - outplanes))).astype(jnp.bfloat16)

    b1p = jnp.pad(b1, (0, P_p - planes)).reshape(1, -1)
    b2p = jnp.pad(b2, (0, P_p - planes)).reshape(1, -1)
    b3p = jnp.pad(b3, (0, Cout_p - outplanes)).reshape(1, -1)

    kernel_params = (w1, b1p, w2f, b2p, w3, b3p)
    torch_params = (conv1_w, conv2_w, conv3_w, s1, b1, s2, b2, s3, b3)
    return kernel_params, torch_params


def reference_forward(x_nchw, torch_params):
    """Pure-JAX NCHW reference matching the PyTorch forward (eval-mode BN)."""
    conv1_w, conv2_w, conv3_w, s1, b1, s2, b2, s3, b3 = torch_params
    dn = ('NCHW', 'OIHW', 'NCHW')

    def bn(o, s, b):
        return o * s.reshape(1, -1, 1, 1) + b.reshape(1, -1, 1, 1)

    out = jax.lax.conv_general_dilated(x_nchw, conv1_w, (1, 1), 'VALID',
                                       dimension_numbers=dn)
    out = jnp.maximum(bn(out, s1, b1), 0.0)
    out = jax.lax.conv_general_dilated(out, conv2_w, (1, 1), ((1, 1), (1, 1)),
                                       dimension_numbers=dn)
    out = jnp.maximum(bn(out, s2, b2), 0.0)
    out = jax.lax.conv_general_dilated(out, conv3_w, (1, 1), 'VALID',
                                       dimension_numbers=dn)
    out = bn(out, s3, b3)
    out = out + x_nchw
    return jnp.maximum(out, 0.0)


if __name__ == "__main__":
    # Small shapes consistent with the module: identity-residual bottleneck,
    # inplanes = planes * expansion.
    N, inplanes, planes, H, W = 2, 32, 8, 8, 8

    key = jax.random.PRNGKey(0)
    kx, kp = jax.random.split(key)
    x = jax.random.normal(kx, (N, inplanes, H, W), jnp.float32)
    kernel_params, torch_params = init_params(kp, inplanes, planes)

    # band_rows=4 -> 2 row-bands per image: exercises the band/halo path.
    out = bottleneck_forward(x, kernel_params, band_rows=4)
    out = jax.block_until_ready(out)

    ref = reference_forward(x, torch_params)
    assert out.shape == ref.shape == (N, planes * 4, H, W)

    # bf16 activations + bf16 MXU operands (f32 accumulation) -> relative tol.
    max_err = jnp.max(jnp.abs(out - ref))
    rel_err = max_err / jnp.max(jnp.abs(ref))
    assert rel_err < 3e-2, f"rel err = {rel_err} (max abs err = {max_err})"
    print("KERNEL_OK")
</pallas_src>

<mosaic_0001>
module attributes {stable_mosaic.version = 11 : i64} {
  func.func @bottleneck_kernel(%arg0: i32, %arg1: i32, %arg2: memref<1x32x128xbf16, #tpu.memory_space<vmem>>, %arg3: memref<1x1x16x128xbf16, #tpu.memory_space<vmem>>, %arg4: memref<128x128xbf16, #tpu.memory_space<vmem>>, %arg5: memref<1x128xf32, #tpu.memory_space<vmem>>, %arg6: memref<3x384x128xbf16, #tpu.memory_space<vmem>>, %arg7: memref<1x128xf32, #tpu.memory_space<vmem>>, %arg8: memref<128x128xbf16, #tpu.memory_space<vmem>>, %arg9: memref<1x128xf32, #tpu.memory_space<vmem>>, %arg10: memref<1x32x128xf32, #tpu.memory_space<vmem>>, %arg11: memref<48x384xbf16, #tpu.memory_space<vmem>>) attributes {dimension_semantics = [#tpu.dimension_semantics<parallel>, #tpu.dimension_semantics<parallel>], iteration_bounds = array<i64: 2, 2>, scalar_prefetch = 0 : i64, scratch_operands = 1 : i64, tpu.core_type = #tpu.core_type<tc>, window_params = [{transform_indices = @transform_0, window_bounds = array<i64: 1, 32, 128>}, {transform_indices = @transform_1, window_bounds = array<i64: 1, 1, 16, 128>}, {pipeline_mode = #tpu.pipeline_mode<synchronous>, transform_indices = @transform_2, window_bounds = array<i64: 128, 128>}, {pipeline_mode = #tpu.pipeline_mode<synchronous>, transform_indices = @transform_3, window_bounds = array<i64: 1, 128>}, {pipeline_mode = #tpu.pipeline_mode<synchronous>, transform_indices = @transform_4, window_bounds = array<i64: 3, 384, 128>}, {pipeline_mode = #tpu.pipeline_mode<synchronous>, transform_indices = @transform_5, window_bounds = array<i64: 1, 128>}, {pipeline_mode = #tpu.pipeline_mode<synchronous>, transform_indices = @transform_6, window_bounds = array<i64: 128, 128>}, {pipeline_mode = #tpu.pipeline_mode<synchronous>, transform_indices = @transform_7, window_bounds = array<i64: 1, 128>}, {transform_indices = @transform_8, window_bounds = array<i64: 1, 32, 128>}]} {
    %c0 = arith.constant 0 : index
    %c0_0 = arith.constant 0 : index
    %c0_1 = arith.constant 0 : index
    %0 = vector.load %arg2[%c0, %c0_0, %c0_1] : memref<1x32x128xbf16, #tpu.memory_space<vmem>>, vector<1x32x128xbf16>
    %1 = vector.shape_cast %0 : vector<1x32x128xbf16> to vector<32x128xbf16>
    %c0_2 = arith.constant 0 : index
    %c0_3 = arith.constant 0 : index
    %c0_4 = arith.constant 0 : index
    %c0_5 = arith.constant 0 : index
    %2 = vector.load %arg3[%c0_2, %c0_3, %c0_4, %c0_5] : memref<1x1x16x128xbf16, #tpu.memory_space<vmem>>, vector<1x1x16x128xbf16>
    %3 = vector.shape_cast %2 : vector<1x1x16x128xbf16> to vector<16x128xbf16>
    %c0_6 = arith.constant 0 : index
    %c0_7 = arith.constant 0 : index
    %4 = vector.load %arg4[%c0_6, %c0_7] : memref<128x128xbf16, #tpu.memory_space<vmem>>, vector<128x128xbf16>
    %cst = arith.constant dense<0.000000e+00> : vector<32x128xf32>
    %5 = tpu.matmul %1, %4, %cst {dimension_numbers = #tpu.dot_dimension_numbers<[1], [0], [0], [1], [0, 0, 1, 1], [], []>} : vector<32x128xbf16>, vector<128x128xbf16>, vector<32x128xf32> -> vector<32x128xf32>
    %c0_8 = arith.constant 0 : index
    %c0_9 = arith.constant 0 : index
    %6 = vector.load %arg5[%c0_8, %c0_9] : memref<1x128xf32, #tpu.memory_space<vmem>>, vector<1x128xf32>
    %7 = vector.broadcast %6 : vector<1x128xf32> to vector<32x128xf32>
    %8 = arith.addf %5, %7 : vector<32x128xf32>
    %cst_10 = arith.constant 0.000000e+00 : f32
    %9 = vector.broadcast %cst_10 : f32 to vector<32x128xf32>
    %10 = arith.maximumf %8, %9 : vector<32x128xf32>
    %c0_11 = arith.constant 0 : index
    %c0_12 = arith.constant 0 : index
    %11 = vector.load %arg4[%c0_11, %c0_12] : memref<128x128xbf16, #tpu.memory_space<vmem>>, vector<128x128xbf16>
    %cst_13 = arith.constant dense<0.000000e+00> : vector<16x128xf32>
    %12 = tpu.matmul %3, %11, %cst_13 {dimension_numbers = #tpu.dot_dimension_numbers<[1], [0], [0], [1], [0, 0, 1, 1], [], []>} : vector<16x128xbf16>, vector<128x128xbf16>, vector<16x128xf32> -> vector<16x128xf32>
    %c0_14 = arith.constant 0 : index
    %c0_15 = arith.constant 0 : index
    %13 = vector.load %arg5[%c0_14, %c0_15] : memref<1x128xf32, #tpu.memory_space<vmem>>, vector<1x128xf32>
    %14 = vector.broadcast %13 : vector<1x128xf32> to vector<16x128xf32>
    %15 = arith.addf %12, %14 : vector<16x128xf32>
    %cst_16 = arith.constant 0.000000e+00 : f32
    %16 = vector.broadcast %cst_16 : f32 to vector<16x128xf32>
    %17 = arith.maximumf %15, %16 : vector<16x128xf32>
    %18 = vector.extract_strided_slice %17 {offsets = [0, 0], sizes = [8, 128], strides = [1, 1]} : vector<16x128xf32> to vector<8x128xf32>
    %c0_i32 = arith.constant 0 : i32
    %19 = arith.cmpi sgt, %arg1, %c0_i32 : i32
    %20 = arith.extui %19 : i1 to i32
    %21 = arith.sitofp %20 : i32 to f32
    %22 = vector.broadcast %21 : f32 to vector<8x128xf32>
    %23 = arith.mulf %18, %22 : vector<8x128xf32>
    %24 = vector.extract_strided_slice %17 {offsets = [8, 0], sizes = [8, 128], strides = [1, 1]} : vector<16x128xf32> to vector<8x128xf32>
    %c1_i32 = arith.constant 1 : i32
    %25 = arith.addi %arg1, %c1_i32 : i32
    %c2_i32 = arith.constant 2 : i32
    %26 = arith.cmpi slt, %25, %c2_i32 : i32
    %27 = arith.extui %26 : i1 to i32
    %28 = arith.sitofp %27 : i32 to f32
    %29 = vector.broadcast %28 : f32 to vector<8x128xf32>
    %30 = arith.mulf %24, %29 : vector<8x128xf32>
    %31 = tpu.iota {dimensions = array<i32: 0>} : vector<8x1xi32>
    %c8_i32 = arith.constant 8 : i32
    %c0_i32_17 = arith.constant 0 : i32
    %32 = arith.cmpi eq, %c8_i32, %c0_i32_17 : i32
    %c1_i32_18 = arith.constant 1 : i32
    %33 = arith.select %32, %c1_i32_18, %c8_i32 : i32
    %34 = vector.broadcast %33 : i32 to vector<8x1xi32>
    %35 = arith.remsi %31, %34 : vector<8x1xi32>
    %c0_i32_19 = arith.constant 0 : i32
    %36 = vector.broadcast %c0_i32_19 : i32 to vector<8x1xi32>
    %37 = arith.cmpi ne, %35, %36 : vector<8x1xi32>
    %c0_i32_20 = arith.constant 0 : i32
    %38 = vector.broadcast %c0_i32_20 : i32 to vector<8x1xi32>
    %39 = arith.cmpi slt, %35, %38 : vector<8x1xi32>
    %c0_i32_21 = arith.constant 0 : i32
    %40 = arith.cmpi slt, %33, %c0_i32_21 : i32
    %41 = vector.broadcast %40 : i1 to vector<8x1xi1>
    %42 = vector.broadcast %41 : vector<8x1xi1> to vector<8x1xi1>
    %43 = arith.xori %39, %42 : vector<8x1xi1>
    %44 = arith.andi %43, %37 : vector<8x1xi1>
    %45 = vector.broadcast %33 : i32 to vector<8x1xi32>
    %46 = arith.addi %35, %45 : vector<8x1xi32>
    %47 = arith.select %44, %46, %35 : vector<8x1xi1>, vector<8x1xi32>
    %c0_i32_22 = arith.constant 0 : i32
    %48 = vector.broadcast %c0_i32_22 : i32 to vector<8x1xi32>
    %49 = arith.cmpi sgt, %47, %48 : vector<8x1xi32>
    %50 = vector.extract_strided_slice %23 {offsets = [7, 0], sizes = [1, 128], strides = [1, 1]} : vector<8x128xf32> to vector<1x128xf32>
    %51 = vector.extract_strided_slice %23 {offsets = [0, 0], sizes = [7, 128], strides = [1, 1]} : vector<8x128xf32> to vector<7x128xf32>
    %52 = tpu.concatenate %50, %51 in 0 : vector<1x128xf32>, vector<7x128xf32> -> vector<8x128xf32>
    %cst_23 = arith.constant 0.000000e+00 : f32
    %53 = vector.shape_cast %49 : vector<8x1xi1> to vector<8x1xi1>
    %54 = vector.broadcast %53 : vector<8x1xi1> to vector<8x128xi1>
    %55 = vector.broadcast %cst_23 : f32 to vector<8x128xf32>
    %56 = arith.select %54, %52, %55 : vector<8x128xi1>, vector<8x128xf32>
    %c7_i32 = arith.constant 7 : i32
    %57 = vector.broadcast %c7_i32 : i32 to vector<8x1xi32>
    %58 = arith.cmpi slt, %47, %57 : vector<8x1xi32>
    %59 = vector.extract_strided_slice %23 {offsets = [1, 0], sizes = [7, 128], strides = [1, 1]} : vector<8x128xf32> to vector<7x128xf32>
    %60 = vector.extract_strided_slice %23 {offsets = [0, 0], sizes = [1, 128], strides = [1, 1]} : vector<8x128xf32> to vector<1x128xf32>
    %61 = tpu.concatenate %59, %60 in 0 : vector<7x128xf32>, vector<1x128xf32> -> vector<8x128xf32>
    %cst_24 = arith.constant 0.000000e+00 : f32
    %62 = vector.shape_cast %58 : vector<8x1xi1> to vector<8x1xi1>
    %63 = vector.broadcast %62 : vector<8x1xi1> to vector<8x128xi1>
    %64 = vector.broadcast %cst_24 : f32 to vector<8x128xf32>
    %65 = arith.select %63, %61, %64 : vector<8x128xi1>, vector<8x128xf32>
    %66 = arith.truncf %56 : vector<8x128xf32> to vector<8x128xbf16>
    %c0_25 = arith.constant 0 : index
    %c0_26 = arith.constant 0 : index
    %67 = vector.load %arg11[%c0_25, %c0_26] : memref<48x384xbf16, #tpu.memory_space<vmem>>, vector<8x128xbf16>
    tpu.vector_store %arg11[%c0_25, %c0_26], %66 {strides = array<i32>} : memref<48x384xbf16, #tpu.memory_space<vmem>>, vector<8x128xbf16>,
    %68 = arith.truncf %23 : vector<8x128xf32> to vector<8x128xbf16>
    %c0_27 = arith.constant 0 : index
    %c128 = arith.constant 128 : index
    %69 = vector.load %arg11[%c0_27, %c128] : memref<48x384xbf16, #tpu.memory_space<vmem>>, vector<8x128xbf16>
    tpu.vector_store %arg11[%c0_27, %c128], %68 {strides = array<i32>} : memref<48x384xbf16, #tpu.memory_space<vmem>>, vector<8x128xbf16>,
    %70 = arith.truncf %65 : vector<8x128xf32> to vector<8x128xbf16>
    %c0_28 = arith.constant 0 : index
    %c256 = arith.constant 256 : index
    %71 = vector.load %arg11[%c0_28, %c256] : memref<48x384xbf16, #tpu.memory_space<vmem>>, vector<8x128xbf16>
    tpu.vector_store %arg11[%c0_28, %c256], %70 {strides = array<i32>} : memref<48x384xbf16, #tpu.memory_space<vmem>>, vector<8x128xbf16>,
    %72 = tpu.iota {dimensions = array<i32: 0>} : vector<32x1xi32>
    %c8_i32_29 = arith.constant 8 : i32
    %c0_i32_30 = arith.constant 0 : i32
    %73 = arith.cmpi eq, %c8_i32_29, %c0_i32_30 : i32
    %c1_i32_31 = arith.constant 1 : i32
    %74 = arith.select %73, %c1_i32_31, %c8_i32_29 : i32
    %75 = vector.broadcast %74 : i32 to vector<32x1xi32>
    %76 = arith.remsi %72, %75 : vector<32x1xi32>
    %c0_i32_32 = arith.constant 0 : i32
    %77 = vector.broadcast %c0_i32_32 : i32 to vector<32x1xi32>
    %78 = arith.cmpi ne, %76, %77 : vector<32x1xi32>
    %c0_i32_33 = arith.constant 0 : i32
    %79 = vector.broadcast %c0_i32_33 : i32 to vector<32x1xi32>
    %80 = arith.cmpi slt, %76, %79 : vector<32x1xi32>
    %c0_i32_34 = arith.constant 0 : i32
    %81 = arith.cmpi slt, %74, %c0_i32_34 : i32
    %82 = vector.broadcast %81 : i1 to vector<32x1xi1>
    %83 = vector.broadcast %82 : vector<32x1xi1> to vector<32x1xi1>
    %84 = arith.xori %80, %83 : vector<32x1xi1>
    %85 = arith.andi %84, %78 : vector<32x1xi1>
    %86 = vector.broadcast %74 : i32 to vector<32x1xi32>
    %87 = arith.addi %76, %86 : vector<32x1xi32>
    %88 = arith.select %85, %87, %76 : vector<32x1xi1>, vector<32x1xi32>
    %c0_i32_35 = arith.constant 0 : i32
    %89 = vector.broadcast %c0_i32_35 : i32 to vector<32x1xi32>
    %90 = arith.cmpi sgt, %88, %89 : vector<32x1xi32>
    %91 = vector.extract_strided_slice %10 {offsets = [31, 0], sizes = [1, 128], strides = [1, 1]} : vector<32x128xf32> to vector<1x128xf32>
    %92 = vector.extract_strided_slice %10 {offsets = [0, 0], sizes = [31, 128], strides = [1, 1]} : vector<32x128xf32> to vector<31x128xf32>
    %93 = tpu.concatenate %91, %92 in 0 : vector<1x128xf32>, vector<31x128xf32> -> vector<32x128xf32>
    %cst_36 = arith.constant 0.000000e+00 : f32
    %94 = vector.shape_cast %90 : vector<32x1xi1> to vector<32x1xi1>
    %95 = vector.broadcast %94 : vector<32x1xi1> to vector<32x128xi1>
    %96 = vector.broadcast %cst_36 : f32 to vector<32x128xf32>
    %97 = arith.select %95, %93, %96 : vector<32x128xi1>, vector<32x128xf32>
    %c7_i32_37 = arith.constant 7 : i32
    %98 = vector.broadcast %c7_i32_37 : i32 to vector<32x1xi32>
    %99 = arith.cmpi slt, %88, %98 : vector<32x1xi32>
    %100 = vector.extract_strided_slice %10 {offsets = [1, 0], sizes = [31, 128], strides = [1, 1]} : vector<32x128xf32> to vector<31x128xf32>
    %101 = vector.extract_strided_slice %10 {offsets = [0, 0], sizes = [1, 128], strides = [1, 1]} : vector<32x128xf32> to vector<1x128xf32>
    %102 = tpu.concatenate %100, %101 in 0 : vector<31x128xf32>, vector<1x128xf32> -> vector<32x128xf32>
    %cst_38 = arith.constant 0.000000e+00 : f32
    %103 = vector.shape_cast %99 : vector<32x1xi1> to vector<32x1xi1>
    %104 = vector.broadcast %103 : vector<32x1xi1> to vector<32x128xi1>
    %105 = vector.broadcast %cst_38 : f32 to vector<32x128xf32>
    %106 = arith.select %104, %102, %105 : vector<32x128xi1>, vector<32x128xf32>
    %107 = arith.truncf %97 : vector<32x128xf32> to vector<32x128xbf16>
    %c8 = arith.constant 8 : index
    %c0_39 = arith.constant 0 : index
    %108 = vector.load %arg11[%c8, %c0_39] : memref<48x384xbf16, #tpu.memory_space<vmem>>, vector<32x128xbf16>
    tpu.vector_store %arg11[%c8, %c0_39], %107 {strides = array<i32>} : memref<48x384xbf16, #tpu.memory_space<vmem>>, vector<32x128xbf16>,
    %109 = arith.truncf %10 : vector<32x128xf32> to vector<32x128xbf16>
    %c8_40 = arith.constant 8 : index
    %c128_41 = arith.constant 128 : index
    %110 = vector.load %arg11[%c8_40, %c128_41] : memref<48x384xbf16, #tpu.memory_space<vmem>>, vector<32x128xbf16>
    tpu.vector_store %arg11[%c8_40, %c128_41], %109 {strides = array<i32>} : memref<48x384xbf16, #tpu.memory_space<vmem>>, vector<32x128xbf16>,
    %111 = arith.truncf %106 : vector<32x128xf32> to vector<32x128xbf16>
    %c8_42 = arith.constant 8 : index
    %c256_43 = arith.constant 256 : index
    %112 = vector.load %arg11[%c8_42, %c256_43] : memref<48x384xbf16, #tpu.memory_space<vmem>>, vector<32x128xbf16>
    tpu.vector_store %arg11[%c8_42, %c256_43], %111 {strides = array<i32>} : memref<48x384xbf16, #tpu.memory_space<vmem>>, vector<32x128xbf16>,
    %113 = tpu.iota {dimensions = array<i32: 0>} : vector<8x1xi32>
    %c8_i32_44 = arith.constant 8 : i32
    %c0_i32_45 = arith.constant 0 : i32
    %114 = arith.cmpi eq, %c8_i32_44, %c0_i32_45 : i32
    %c1_i32_46 = arith.constant 1 : i32
    %115 = arith.select %114, %c1_i32_46, %c8_i32_44 : i32
    %116 = vector.broadcast %115 : i32 to vector<8x1xi32>
    %117 = arith.remsi %113, %116 : vector<8x1xi32>
    %c0_i32_47 = arith.constant 0 : i32
    %118 = vector.broadcast %c0_i32_47 : i32 to vector<8x1xi32>
    %119 = arith.cmpi ne, %117, %118 : vector<8x1xi32>
    %c0_i32_48 = arith.constant 0 : i32
    %120 = vector.broadcast %c0_i32_48 : i32 to vector<8x1xi32>
    %121 = arith.cmpi slt, %117, %120 : vector<8x1xi32>
    %c0_i32_49 = arith.constant 0 : i32
    %122 = arith.cmpi slt, %115, %c0_i32_49 : i32
    %123 = vector.broadcast %122 : i1 to vector<8x1xi1>
    %124 = vector.broadcast %123 : vector<8x1xi1> to vector<8x1xi1>
    %125 = arith.xori %121, %124 : vector<8x1xi1>
    %126 = arith.andi %125, %119 : vector<8x1xi1>
    %127 = vector.broadcast %115 : i32 to vector<8x1xi32>
    %128 = arith.addi %117, %127 : vector<8x1xi32>
    %129 = arith.select %126, %128, %117 : vector<8x1xi1>, vector<8x1xi32>
    %c0_i32_50 = arith.constant 0 : i32
    %130 = vector.broadcast %c0_i32_50 : i32 to vector<8x1xi32>
    %131 = arith.cmpi sgt, %129, %130 : vector<8x1xi32>
    %132 = vector.extract_strided_slice %30 {offsets = [7, 0], sizes = [1, 128], strides = [1, 1]} : vector<8x128xf32> to vector<1x128xf32>
    %133 = vector.extract_strided_slice %30 {offsets = [0, 0], sizes = [7, 128], strides = [1, 1]} : vector<8x128xf32> to vector<7x128xf32>
    %134 = tpu.concatenate %132, %133 in 0 : vector<1x128xf32>, vector<7x128xf32> -> vector<8x128xf32>
    %cst_51 = arith.constant 0.000000e+00 : f32
    %135 = vector.shape_cast %131 : vector<8x1xi1> to vector<8x1xi1>
    %136 = vector.broadcast %135 : vector<8x1xi1> to vector<8x128xi1>
    %137 = vector.broadcast %cst_51 : f32 to vector<8x128xf32>
    %138 = arith.select %136, %134, %137 : vector<8x128xi1>, vector<8x128xf32>
    %c7_i32_52 = arith.constant 7 : i32
    %139 = vector.broadcast %c7_i32_52 : i32 to vector<8x1xi32>
    %140 = arith.cmpi slt, %129, %139 : vector<8x1xi32>
    %141 = vector.extract_strided_slice %30 {offsets = [1, 0], sizes = [7, 128], strides = [1, 1]} : vector<8x128xf32> to vector<7x128xf32>
    %142 = vector.extract_strided_slice %30 {offsets = [0, 0], sizes = [1, 128], strides = [1, 1]} : vector<8x128xf32> to vector<1x128xf32>
    %143 = tpu.concatenate %141, %142 in 0 : vector<7x128xf32>, vector<1x128xf32> -> vector<8x128xf32>
    %cst_53 = arith.constant 0.000000e+00 : f32
    %144 = vector.shape_cast %140 : vector<8x1xi1> to vector<8x1xi1>
    %145 = vector.broadcast %144 : vector<8x1xi1> to vector<8x128xi1>
    %146 = vector.broadcast %cst_53 : f32 to vector<8x128xf32>
    %147 = arith.select %145, %143, %146 : vector<8x128xi1>, vector<8x128xf32>
    %148 = arith.truncf %138 : vector<8x128xf32> to vector<8x128xbf16>
    %c40 = arith.constant 40 : index
    %c0_54 = arith.constant 0 : index
    %149 = vector.load %arg11[%c40, %c0_54] : memref<48x384xbf16, #tpu.memory_space<vmem>>, vector<8x128xbf16>
    tpu.vector_store %arg11[%c40, %c0_54], %148 {strides = array<i32>} : memref<48x384xbf16, #tpu.memory_space<vmem>>, vector<8x128xbf16>,
    %150 = arith.truncf %30 : vector<8x128xf32> to vector<8x128xbf16>
    %c40_55 = arith.constant 40 : index
    %c128_56 = arith.constant 128 : index
    %151 = vector.load %arg11[%c40_55, %c128_56] : memref<48x384xbf16, #tpu.memory_space<vmem>>, vector<8x128xbf16>
    tpu.vector_store %arg11[%c40_55, %c128_56], %150 {strides = array<i32>} : memref<48x384xbf16, #tpu.memory_space<vmem>>, vector<8x128xbf16>,
    %152 = arith.truncf %147 : vector<8x128xf32> to vector<8x128xbf16>
    %c40_57 = arith.constant 40 : index
    %c256_58 = arith.constant 256 : index
    %153 = vector.load %arg11[%c40_57, %c256_58] : memref<48x384xbf16, #tpu.memory_space<vmem>>, vector<8x128xbf16>
    tpu.vector_store %arg11[%c40_57, %c256_58], %152 {strides = array<i32>} : memref<48x384xbf16, #tpu.memory_space<vmem>>, vector<8x128xbf16>,
    %c0_59 = arith.constant 0 : index
    %c0_60 = arith.constant 0 : index
    %154 = vector.load %arg11[%c0_59, %c0_60] : memref<48x384xbf16, #tpu.memory_space<vmem>>, vector<32x384xbf16>
    %c0_61 = arith.constant 0 : index
    %c0_62 = arith.constant 0 : index
    %c0_63 = arith.constant 0 : index
    %155 = vector.load %arg6[%c0_61, %c0_62, %c0_63] : memref<3x384x128xbf16, #tpu.memory_space<vmem>>, vector<1x384x128xbf16>
    %156 = vector.shape_cast %155 : vector<1x384x128xbf16> to vector<384x128xbf16>
    %cst_64 = arith.constant dense<0.000000e+00> : vector<32x128xf32>
    %157 = tpu.matmul %154, %156, %cst_64 {dimension_numbers = #tpu.dot_dimension_numbers<[1], [0], [0], [1], [0, 0, 1, 1], [], []>} : vector<32x384xbf16>, vector<384x128xbf16>, vector<32x128xf32> -> vector<32x128xf32>
    %c8_65 = arith.constant 8 : index
    %c0_66 = arith.constant 0 : index
    %158 = vector.load %arg11[%c8_65, %c0_66] : memref<48x384xbf16, #tpu.memory_space<vmem>>, vector<32x384xbf16>
    %c1 = arith.constant 1 : index
    %c0_67 = arith.constant 0 : index
    %c0_68 = arith.constant 0 : index
    %159 = vector.load %arg6[%c1, %c0_67, %c0_68] : memref<3x384x128xbf16, #tpu.memory_space<vmem>>, vector<1x384x128xbf16>
    %160 = vector.shape_cast %159 : vector<1x384x128xbf16> to vector<384x128xbf16>
    %cst_69 = arith.constant dense<0.000000e+00> : vector<32x128xf32>
    %161 = tpu.matmul %158, %160, %cst_69 {dimension_numbers = #tpu.dot_dimension_numbers<[1], [0], [0], [1], [0, 0, 1, 1], [], []>} : vector<32x384xbf16>, vector<384x128xbf16>, vector<32x128xf32> -> vector<32x128xf32>
    %162 = arith.addf %157, %161 : vector<32x128xf32>
    %c16 = arith.constant 16 : index
    %c0_70 = arith.constant 0 : index
    %163 = vector.load %arg11[%c16, %c0_70] : memref<48x384xbf16, #tpu.memory_space<vmem>>, vector<32x384xbf16>
    %c2 = arith.constant 2 : index
    %c0_71 = arith.constant 0 : index
    %c0_72 = arith.constant 0 : index
    %164 = vector.load %arg6[%c2, %c0_71, %c0_72] : memref<3x384x128xbf16, #tpu.memory_space<vmem>>, vector<1x384x128xbf16>
    %165 = vector.shape_cast %164 : vector<1x384x128xbf16> to vector<384x128xbf16>
    %cst_73 = arith.constant dense<0.000000e+00> : vector<32x128xf32>
    %166 = tpu.matmul %163, %165, %cst_73 {dimension_numbers = #tpu.dot_dimension_numbers<[1], [0], [0], [1], [0, 0, 1, 1], [], []>} : vector<32x384xbf16>, vector<384x128xbf16>, vector<32x128xf32> -> vector<32x128xf32>
    %167 = arith.addf %162, %166 : vector<32x128xf32>
    %c0_74 = arith.constant 0 : index
    %c0_75 = arith.constant 0 : index
    %168 = vector.load %arg7[%c0_74, %c0_75] : memref<1x128xf32, #tpu.memory_space<vmem>>, vector<1x128xf32>
    %169 = vector.broadcast %168 : vector<1x128xf32> to vector<32x128xf32>
    %170 = arith.addf %167, %169 : vector<32x128xf32>
    %cst_76 = arith.constant 0.000000e+00 : f32
    %171 = vector.broadcast %cst_76 : f32 to vector<32x128xf32>
    %172 = arith.maximumf %170, %171 : vector<32x128xf32>
    %173 = arith.truncf %172 : vector<32x128xf32> to vector<32x128xbf16>
    %c0_77 = arith.constant 0 : index
    %c0_78 = arith.constant 0 : index
    %174 = vector.load %arg8[%c0_77, %c0_78] : memref<128x128xbf16, #tpu.memory_space<vmem>>, vector<128x128xbf16>
    %cst_79 = arith.constant dense<0.000000e+00> : vector<32x128xf32>
    %175 = tpu.matmul %173, %174, %cst_79 {dimension_numbers = #tpu.dot_dimension_numbers<[1], [0], [0], [1], [0, 0, 1, 1], [], []>} : vector<32x128xbf16>, vector<128x128xbf16>, vector<32x128xf32> -> vector<32x128xf32>
    %c0_80 = arith.constant 0 : index
    %c0_81 = arith.constant 0 : index
    %176 = vector.load %arg9[%c0_80, %c0_81] : memref<1x128xf32, #tpu.memory_space<vmem>>, vector<1x128xf32>
    %177 = vector.broadcast %176 : vector<1x128xf32> to vector<32x128xf32>
    %178 = arith.addf %175, %177 : vector<32x128xf32>
    %179 = arith.extf %1 : vector<32x128xbf16> to vector<32x128xf32>
    %180 = arith.addf %178, %179 : vector<32x128xf32>
    %cst_82 = arith.constant 0.000000e+00 : f32
    %181 = vector.broadcast %cst_82 : f32 to vector<32x128xf32>
    %182 = arith.maximumf %180, %181 : vector<32x128xf32>
    %c0_83 = arith.constant 0 : index
    %c0_84 = arith.constant 0 : index
    %c0_85 = arith.constant 0 : index
    %183 = vector.load %arg10[%c0_83, %c0_84, %c0_85] : memref<1x32x128xf32, #tpu.memory_space<vmem>>, vector<1x32x128xf32>
    %184 = vector.shape_cast %183 : vector<1x32x128xf32> to vector<32x128xf32>
    %185 = vector.shape_cast %182 : vector<32x128xf32> to vector<1x32x128xf32>
    tpu.vector_store %arg10[%c0_83, %c0_84, %c0_85], %185 {strides = array<i32>} : memref<1x32x128xf32, #tpu.memory_space<vmem>>, vector<1x32x128xf32>,
    return
  }
  func.func @transform_0(%arg0: i32, %arg1: i32) -> (i32, i32, i32) {
    %c0_i32 = arith.constant 0 : i32
    %c0_i32_0 = arith.constant 0 : i32
    return %arg0, %arg1, %c0_i32 : i32, i32, i32
  }
  func.func @transform_1(%arg0: i32, %arg1: i32) -> (i32, i32, i32, i32) {
    %c0_i32 = arith.constant 0 : i32
    %c0_i32_0 = arith.constant 0 : i32
    %c0_i32_1 = arith.constant 0 : i32
    return %arg0, %arg1, %c0_i32, %c0_i32_0 : i32, i32, i32, i32
  }
  func.func @transform_2(%arg0: i32, %arg1: i32) -> (i32, i32) {
    %c0_i32 = arith.constant 0 : i32
    %c0_i32_0 = arith.constant 0 : i32
    %c0_i32_1 = arith.constant 0 : i32
    return %c0_i32, %c0_i32_0 : i32, i32
  }
  func.func @transform_3(%arg0: i32, %arg1: i32) -> (i32, i32) {
    %c0_i32 = arith.constant 0 : i32
    %c0_i32_0 = arith.constant 0 : i32
    %c0_i32_1 = arith.constant 0 : i32
    return %c0_i32, %c0_i32_0 : i32, i32
  }
  func.func @transform_4(%arg0: i32, %arg1: i32) -> (i32, i32, i32) {
    %c0_i32 = arith.constant 0 : i32
    %c0_i32_0 = arith.constant 0 : i32
    %c0_i32_1 = arith.constant 0 : i32
    %c0_i32_2 = arith.constant 0 : i32
    return %c0_i32, %c0_i32_0, %c0_i32_1 : i32, i32, i32
  }
  func.func @transform_5(%arg0: i32, %arg1: i32) -> (i32, i32) {
    %c0_i32 = arith.constant 0 : i32
    %c0_i32_0 = arith.constant 0 : i32
    %c0_i32_1 = arith.constant 0 : i32
    return %c0_i32, %c0_i32_0 : i32, i32
  }
  func.func @transform_6(%arg0: i32, %arg1: i32) -> (i32, i32) {
    %c0_i32 = arith.constant 0 : i32
    %c0_i32_0 = arith.constant 0 : i32
    %c0_i32_1 = arith.constant 0 : i32
    return %c0_i32, %c0_i32_0 : i32, i32
  }
  func.func @transform_7(%arg0: i32, %arg1: i32) -> (i32, i32) {
    %c0_i32 = arith.constant 0 : i32
    %c0_i32_0 = arith.constant 0 : i32
    %c0_i32_1 = arith.constant 0 : i32
    return %c0_i32, %c0_i32_0 : i32, i32
  }
  func.func @transform_8(%arg0: i32, %arg1: i32) -> (i32, i32, i32) {
    %c0_i32 = arith.constant 0 : i32
    %c0_i32_0 = arith.constant 0 : i32
    return %arg0, %arg1, %c0_i32 : i32, i32, i32
  }
}

</mosaic_0001>

<llo_original>
// kernel: tpu_custom_call.1
$region0: #{tpu_custom_call.1}
  #allocation0 [shape = 'u32[]', space=smem, size = 0x4, offset = 0x4, fixed_abs, tag = 'smem constant byte address 0x4 - core index']
  #allocation1 [shape = 'u32[144,128]{1,0:T(1,128)}', space=vmem, size = 0x12000, scoped, tag = 'internal scratch']
  #allocation2 [shape = 'bf16[48,384]{1,0:T(16,128)(2,1)}', space=vmem, size = 0x9000, scoped, tag = 'scratch operand']
  %s0 = inlined_call_operand.hbm [shape: bf16[2,64,128], index: 0, kind: input, shape index: {}]
  %s1 = inlined_call_operand.hbm [shape: bf16[2,2,16,128], index: 1, kind: input, shape index: {}]
  %s2 = inlined_call_operand.hbm [shape: bf16[128,128], index: 2, kind: input, shape index: {}]
  %s3 = inlined_call_operand.vmem [shape: f32[1,128], index: 3, kind: input, shape index: {}]
  %s4 = inlined_call_operand.hbm [shape: bf16[3,384,128], index: 4, kind: input, shape index: {}]
  %s5 = inlined_call_operand.vmem [shape: f32[1,128], index: 5, kind: input, shape index: {}]
  %s6 = inlined_call_operand.hbm [shape: bf16[128,128], index: 6, kind: input, shape index: {}]
  %s7 = inlined_call_operand.vmem [shape: f32[1,128], index: 7, kind: input, shape index: {}]
  %s8 = inlined_call_operand.hbm [shape: f32[2,64,128], index: 8, kind: output, shape index: {}]
  %s9 = sld [smem:[#allocation0]]
  $region85: #{tpu_custom_call.1} parent=0
    _
  %s11 = ssub.s32 1, %s9
  %s12 = scalar_select 0, %s11, %s9
  $region1: #{tpu_custom_call.1} parent=0
    #allocation3 [shape = 'u8[16384]{0}', space=vmem, size = 0x4000, scoped, tag = 'input window, operand 0']
    #allocation4 [shape = 's32[2]{0}', space=sflag, size = 0x8, scoped, tag = 'scoped memory for tpu_custom_call.1']
    #allocation5 [shape = 's32[2]{0}', space=sflag, size = 0x8, scoped, tag = 'scoped memory for tpu_custom_call.1']
    #allocation6 [shape = 'u8[8192]{0}', space=vmem, size = 0x2000, scoped, tag = 'input window, operand 1']
    #allocation7 [shape = 's32[2]{0}', space=sflag, size = 0x8, scoped, tag = 'scoped memory for tpu_custom_call.1']
    #allocation8 [shape = 'u8[32768]{0}', space=vmem, size = 0x8000, scoped, tag = 'input window, operand 2, single buffered']
    #allocation9 [shape = 'u8[294912]{0}', space=vmem, size = 0x48000, scoped, tag = 'input window, operand 4, single buffered']
    #allocation10 [shape = 's32[1]{0}', space=sflag, size = 0x4, scoped, tag = 'scoped memory for tpu_custom_call.1']
    #allocation11 [shape = 'u8[32768]{0}', space=vmem, size = 0x8000, scoped, tag = 'input window, operand 6, single buffered']
    #allocation12 [shape = 'u8[32768]{0}', space=vmem, size = 0x8000, scoped, tag = 'output window, operand 0']
    %13 = vsyncpa [#allocation4], 0
    %s14 = scalar_lea.sflag [#allocation4], 1
    %15 = vsyncpa %s14, 0
    %16 = vsyncpa [#allocation7], 0
    %s17 = scalar_lea.sflag [#allocation7], 1
    %18 = vsyncpa %s17, 0
    %19 = vsyncpa [#allocation10], 0
    %20 = vsyncpa [#allocation5], 0
    %s21 = scalar_lea.sflag [#allocation5], 1
    %22 = vsyncpa %s21, 0
    loop: start=0, step=1, limit=6
    $region2: #{tpu_custom_call.1} parent=1 // loop_pre_header
      _
    $region3: #{tpu_custom_call.1} parent=1 // loop_header
      %s24 = sphi 0, %s28
      %p25 = scmp.ge.s32.totalorder %s24, 6
      %s31 = sphi 0, %s43
      %s32 = sphi 0, %s39
      %s33 = sphi 0, %s31
      %s34 = sphi 0, %s32
      %s35 = sphi 0, %s33
      %s36 = sphi 0, %s34
      %s48 = sphi 0, %s50
      %s51 = sphi 0, %s48
      %s52 = sphi 0, %s51
      %s68 = sphi 0, %s52
      %s76 = sphi 0, %s78
      %s79 = sphi 0, %s76
      %s80 = sphi 0, %s79
      %s96 = sphi 0, %s80
      %s100 = sphi 0, %s100
      %s102 = sphi 0, %s100
      %s103 = sphi 0, %s102
      %s117 = sphi 0, %s103
      %s121 = sphi 0, %s121
      %s123 = sphi 0, %s121
      %s124 = sphi 0, %s123
      %s138 = sphi 0, %s124
      %s142 = sphi 0, %s142
      %s144 = sphi 0, %s142
      %s145 = sphi 0, %s144
      %s159 = sphi 0, %s145
      %s163 = sphi 0, %s163
      %s165 = sphi 0, %s163
      %s166 = sphi 0, %s165
      %s180 = sphi 0, %s166
      %s184 = sphi 0, %s184
      %s186 = sphi 0, %s184
      %s187 = sphi 0, %s186
      %s201 = sphi 0, %s187
      %s205 = sphi 0, %s205
      %s207 = sphi 0, %s205
      %s208 = sphi 0, %s207
      %s222 = sphi 0, %s208
      %s230 = sphi 0, %s232
      %s233 = sphi 0, %s230
      %s234 = sphi 0, %s233
      %s250 = sphi 0, %s234
    $region4: #{tpu_custom_call.1} parent=1 // loop_header_branch
      %27 = sbr.rel (%p25) target = $region8
    $region5: #{tpu_custom_call.1} parent=1 // loop_body
      %s29 = ssub.s32 %s24, 1
      %s30 = ssub.s32 %s24, 2
      %s37 = sadd.s32 1, %s32
      %p38 = scmp.ge.s32.totalorder %s37, 2
      %s39 = scalar_select %p38, 0, %s37
      %s40 = sadd.s32 1, %s31
      %s41 = scalar_select %p38, %s40, %s31
      %p42 = scmp.ge.s32.totalorder %s41, 2
      %s43 = scalar_select %p42, 0, %s41
      %s44 = ssub.s32 %s31, %s43
      %s45 = ssub.s32 %s32, %s39
      %s46 = sor.u32 %s44, %s45
      %p47 = scmp.eq.s32.totalorder %s46, 0
      %s49 = sadd.s32 %s48, 1
      %s50 = scalar_select %p47, %s48, %s49
      %p53 = pneg %p47
      %p54 = scmp.eq.s32.totalorder %s24, 3
      %p55 = por %p53, %p54
      %p56 = scmp.ne.s32.totalorder %s48, %s51
      %p57 = scmp.eq.s32.totalorder %s24, 0
      %p58 = por %p56, %p57
      %p59 = scmp.ne.s32.totalorder %s48, %s51
      %p60 = scmp.eq.s32.totalorder %s29, 3
      %p61 = por %p59, %p60
      %p62 = scmp.ne.s32.totalorder %s51, %s52
      %p63 = scmp.eq.s32.totalorder %s29, 0
      %p64 = por %p62, %p63
      %p65 = scmp.ne.s32.totalorder %s51, %s52
      %p66 = scmp.eq.s32.totalorder %s30, 3
      %p67 = por %p65, %p66
      %p69 = scmp.ne.s32.totalorder %s52, %s68
      %p70 = scmp.eq.s32.totalorder %s30, 0
      %p71 = por %p69, %p70
      %s72 = ssub.s32 %s31, %s43
      %s73 = ssub.s32 %s32, %s39
      %s74 = sor.u32 %s72, %s73
      %p75 = scmp.eq.s32.totalorder %s74, 0
      %s77 = sadd.s32 %s76, 1
      %s78 = scalar_select %p75, %s76, %s77
      %p81 = pneg %p75
      %p82 = scmp.eq.s32.totalorder %s24, 3
      %p83 = por %p81, %p82
      %p84 = scmp.ne.s32.totalorder %s76, %s79
      %p85 = scmp.eq.s32.totalorder %s24, 0
      %p86 = por %p84, %p85
      %p87 = scmp.ne.s32.totalorder %s76, %s79
      %p88 = scmp.eq.s32.totalorder %s29, 3
      %p89 = por %p87, %p88
      %p90 = scmp.ne.s32.totalorder %s79, %s80
      %p91 = scmp.eq.s32.totalorder %s29, 0
      %p92 = por %p90, %p91
      %p93 = scmp.ne.s32.totalorder %s79, %s80
      %p94 = scmp.eq.s32.totalorder %s30, 3
      %p95 = por %p93, %p94
      %p97 = scmp.ne.s32.totalorder %s80, %s96
      %p98 = scmp.eq.s32.totalorder %s30, 0
      %p99 = por %p97, %p98
      %s101 = sadd.s32 %s100, 1
      %p104 = scmp.eq.s32.totalorder %s24, 3
      %p105 = scmp.ne.s32.totalorder %s100, %s102
      %p106 = scmp.eq.s32.totalorder %s24, 0
      %p107 = por %p105, %p106
      %p108 = scmp.ne.s32.totalorder %s100, %s102
      %p109 = scmp.eq.s32.totalorder %s29, 3
      %p110 = por %p108, %p109
      %p111 = scmp.ne.s32.totalorder %s102, %s103
      %p112 = scmp.eq.s32.totalorder %s29, 0
      %p113 = por %p111, %p112
      %p114 = scmp.ne.s32.totalorder %s102, %s103
      %p115 = scmp.eq.s32.totalorder %s30, 3
      %p116 = por %p114, %p115
      %p118 = scmp.ne.s32.totalorder %s103, %s117
      %p119 = scmp.eq.s32.totalorder %s30, 0
      %p120 = por %p118, %p119
      %s122 = sadd.s32 %s121, 1
      %p125 = scmp.eq.s32.totalorder %s24, 3
      %p126 = scmp.ne.s32.totalorder %s121, %s123
      %p127 = scmp.eq.s32.totalorder %s24, 0
      %p128 = por %p126, %p127
      %p129 = scmp.ne.s32.totalorder %s121, %s123
      %p130 = scmp.eq.s32.totalorder %s29, 3
      %p131 = por %p129, %p130
      %p132 = scmp.ne.s32.totalorder %s123, %s124
      %p133 = scmp.eq.s32.totalorder %s29, 0
      %p134 = por %p132, %p133
      %p135 = scmp.ne.s32.totalorder %s123, %s124
      %p136 = scmp.eq.s32.totalorder %s30, 3
      %p137 = por %p135, %p136
      %p139 = scmp.ne.s32.totalorder %s124, %s138
      %p140 = scmp.eq.s32.totalorder %s30, 0
      %p141 = por %p139, %p140
      %s143 = sadd.s32 %s142, 1
      %p146 = scmp.eq.s32.totalorder %s24, 3
      %p147 = scmp.ne.s32.totalorder %s142, %s144
      %p148 = scmp.eq.s32.totalorder %s24, 0
      %p149 = por %p147, %p148
      %p150 = scmp.ne.s32.totalorder %s142, %s144
      %p151 = scmp.eq.s32.totalorder %s29, 3
      %p152 = por %p150, %p151
      %p153 = scmp.ne.s32.totalorder %s144, %s145
      %p154 = scmp.eq.s32.totalorder %s29, 0
      %p155 = por %p153, %p154
      %p156 = scmp.ne.s32.totalorder %s144, %s145
      %p157 = scmp.eq.s32.totalorder %s30, 3
      %p158 = por %p156, %p157
      %p160 = scmp.ne.s32.totalorder %s145, %s159
      %p161 = scmp.eq.s32.totalorder %s30, 0
      %p162 = por %p160, %p161
      %s164 = sadd.s32 %s163, 1
      %p167 = scmp.eq.s32.totalorder %s24, 3
      %p168 = scmp.ne.s32.totalorder %s163, %s165
      %p169 = scmp.eq.s32.totalorder %s24, 0
      %p170 = por %p168, %p169
      %p171 = scmp.ne.s32.totalorder %s163, %s165
      %p172 = scmp.eq.s32.totalorder %s29, 3
      %p173 = por %p171, %p172
      %p174 = scmp.ne.s32.totalorder %s165, %s166
      %p175 = scmp.eq.s32.totalorder %s29, 0
      %p176 = por %p174, %p175
      %p177 = scmp.ne.s32.totalorder %s165, %s166
      %p178 = scmp.eq.s32.totalorder %s30, 3
      %p179 = por %p177, %p178
      %p181 = scmp.ne.s32.totalorder %s166, %s180
      %p182 = scmp.eq.s32.totalorder %s30, 0
      %p183 = por %p181, %p182
      %s185 = sadd.s32 %s184, 1
      %p188 = scmp.eq.s32.totalorder %s24, 3
      %p189 = scmp.ne.s32.totalorder %s184, %s186
      %p190 = scmp.eq.s32.totalorder %s24, 0
      %p191 = por %p189, %p190
      %p192 = scmp.ne.s32.totalorder %s184, %s186
      %p193 = scmp.eq.s32.totalorder %s29, 3
      %p194 = por %p192, %p193
      %p195 = scmp.ne.s32.totalorder %s186, %s187
      %p196 = scmp.eq.s32.totalorder %s29, 0
      %p197 = por %p195, %p196
      %p198 = scmp.ne.s32.totalorder %s186, %s187
      %p199 = scmp.eq.s32.totalorder %s30, 3
      %p200 = por %p198, %p199
      %p202 = scmp.ne.s32.totalorder %s187, %s201
      %p203 = scmp.eq.s32.totalorder %s30, 0
      %p204 = por %p202, %p203
      %s206 = sadd.s32 %s205, 1
      %p209 = scmp.eq.s32.totalorder %s24, 3
      %p210 = scmp.ne.s32.totalorder %s205, %s207
      %p211 = scmp.eq.s32.totalorder %s24, 0
      %p212 = por %p210, %p211
      %p213 = scmp.ne.s32.totalorder %s205, %s207
      %p214 = scmp.eq.s32.totalorder %s29, 3
      %p215 = por %p213, %p214
      %p216 = scmp.ne.s32.totalorder %s207, %s208
      %p217 = scmp.eq.s32.totalorder %s29, 0
      %p218 = por %p216, %p217
      %p219 = scmp.ne.s32.totalorder %s207, %s208
      %p220 = scmp.eq.s32.totalorder %s30, 3
      %p221 = por %p219, %p220
      %p223 = scmp.ne.s32.totalorder %s208, %s222
      %p224 = scmp.eq.s32.totalorder %s30, 0
      %p225 = por %p223, %p224
      %s226 = ssub.s32 %s31, %s43
      %s227 = ssub.s32 %s32, %s39
      %s228 = sor.u32 %s226, %s227
      %p229 = scmp.eq.s32.totalorder %s228, 0
      %s231 = sadd.s32 %s230, 1
      %s232 = scalar_select %p229, %s230, %s231
      %p235 = pneg %p229
      %p236 = scmp.eq.s32.totalorder %s24, 3
      %p237 = por %p235, %p236
      %p238 = scmp.ne.s32.totalorder %s230, %s233
      %p239 = scmp.eq.s32.totalorder %s24, 0
      %p240 = por %p238, %p239
      %p241 = scmp.ne.s32.totalorder %s230, %s233
      %p242 = scmp.eq.s32.totalorder %s29, 3
      %p243 = por %p241, %p242
      %p244 = scmp.ne.s32.totalorder %s233, %s234
      %p245 = scmp.eq.s32.totalorder %s29, 0
      %p246 = por %p244, %p245
      %p247 = scmp.ne.s32.totalorder %s233, %s234
      %p248 = scmp.eq.s32.totalorder %s30, 3
      %p249 = por %p247, %p248
      %p251 = scmp.ne.s32.totalorder %s234, %s250
      %p252 = scmp.eq.s32.totalorder %s30, 0
      %p253 = por %p251, %p252
      %p254 = scmp.le.s32.totalorder 1, %s24
      %p255 = scmp.lt.s32.totalorder %s24, 5
      %p256 = pnand %p254, %p255
      %p257 = pneg %p256
      // Predicated region
      $region9: #{tpu_custom_call.1} parent=5 // pred_check
        _
      $region10: #{tpu_custom_call.1} parent=5 // pred_check_branch
        %259 = sbr.rel (%p256) target = $region12
      $region11: #{tpu_custom_call.1} parent=5 // pred_region
        %s260 = ssub.s32 %s24, 1
        // Predicated region
        $region13: #{tpu_custom_call.1} parent=11 // pred_check
          %p261 = pneg %p113
        $region14: #{tpu_custom_call.1} parent=11 // pred_check_branch
          %263 = sbr.rel (%p261) target = $region16
        $region15: #{tpu_custom_call.1} parent=11 // pred_region
          %s265 = ssub.s32 1024, 1024
          %266 = vsyncadd [#allocation7], %s265
          %s267 = sshll.u32 [#allocation8], 4
          %s268 = int_to_ptr.vmem [resolvable:$true] %s267
          %273 = dma.hbm_to_vmem [thread:$0]  %s2, 1024, %s268, [#allocation7], 64, 64, 4
        $region16: #{tpu_custom_call.1} parent=11 // pred_fallthru
          _
        // Predicated region
        $region17: #{tpu_custom_call.1} parent=11 // pred_check
          %p274 = pneg %p134
        $region18: #{tpu_custom_call.1} parent=11 // pred_check_branch
          %276 = sbr.rel (%p274) target = $region20
        $region19: #{tpu_custom_call.1} parent=11 // pred_region
          _
        $region20: #{tpu_custom_call.1} parent=11 // pred_fallthru
          _
        // Predicated region
        $region21: #{tpu_custom_call.1} parent=11 // pred_check
          %p277 = pneg %p155
        $region22: #{tpu_custom_call.1} parent=11 // pred_check_branch
          %279 = sbr.rel (%p277) target = $region24
        $region23: #{tpu_custom_call.1} parent=11 // pred_region
          %s281 = ssub.s32 9216, 9216
          %282 = vsyncadd [#allocation10], %s281
          %s283 = sshll.u32 [#allocation9], 4
          %s284 = int_to_ptr.vmem [resolvable:$true] %s283
          %289 = dma.hbm_to_vmem [thread:$0]  %s4, 9216, %s284, [#allocation10], 64, 64, 4
        $region24: #{tpu_custom_call.1} parent=11 // pred_fallthru
          _
        // Predicated region
        $region25: #{tpu_custom_call.1} parent=11 // pred_check
          %p290 = pneg %p176
        $region26: #{tpu_custom_call.1} parent=11 // pred_check_branch
          %292 = sbr.rel (%p290) target = $region28
        $region27: #{tpu_custom_call.1} parent=11 // pred_region
          _
        $region28: #{tpu_custom_call.1} parent=11 // pred_fallthru
          _
        // Predicated region
        $region29: #{tpu_custom_call.1} parent=11 // pred_check
          %p293 = pneg %p197
        $region30: #{tpu_custom_call.1} parent=11 // pred_check_branch
          %295 = sbr.rel (%p293) target = $region32
        $region31: #{tpu_custom_call.1} parent=11 // pred_region
          %s297 = ssub.s32 1024, 1024
          %298 = vsyncadd [#allocation10], %s297
          %s299 = sshll.u32 [#allocation11], 4
          %s300 = int_to_ptr.vmem [resolvable:$true] %s299
          %305 = dma.hbm_to_vmem [thread:$0]  %s6, 1024, %s300, [#allocation10], 64, 64, 4
        $region32: #{tpu_custom_call.1} parent=11 // pred_fallthru
          _
        // Predicated region
        $region33: #{tpu_custom_call.1} parent=11 // pred_check
          %p306 = pneg %p218
        $region34: #{tpu_custom_call.1} parent=11 // pred_check_branch
          %308 = sbr.rel (%p306) target = $region36
        $region35: #{tpu_custom_call.1} parent=11 // pred_region
          _
        $region36: #{tpu_custom_call.1} parent=11 // pred_fallthru
          _
      $region12: #{tpu_custom_call.1} parent=5 // pred_fallthru
        _
      %p309 = scmp.lt.s32.totalorder %s24, 4
      // Predicated region
      $region37: #{tpu_custom_call.1} parent=5 // pred_check
        %p310 = pneg %p309
      $region38: #{tpu_custom_call.1} parent=5 // pred_check_branch
        %312 = sbr.rel (%p310) target = $region40
      $region39: #{tpu_custom_call.1} parent=5 // pred_region
        // Predicated region
        $region41: #{tpu_custom_call.1} parent=39 // pred_check
          %p313 = pneg %p58
        $region42: #{tpu_custom_call.1} parent=39 // pred_check_branch
          %315 = sbr.rel (%p313) target = $region44
        $region43: #{tpu_custom_call.1} parent=39 // pred_region
          %s316 = sand.u32 %s48, 1
          %s317 = scalar_lea.sflag [#allocation4], %s316
          %s318 = sand.u32 %s48, 1
          %s319 = smul.addr %s318, 16
          %s320 = scalar_lea.vmem [#allocation3], %s319
          %s321 = smul.u32 4, %s32
          %s323 = ssub.s32 256, 256
          %324 = vsyncadd %s317, %s323
          %s325 = smul.addr %s31, 8
          %s326 = sadd.s32 %s321, %s325
          %s327 = smul.addr %s326, 64
          %s328 = scalar_lea.hbm %s0, %s327
          %s329 = sshll.u32 %s320, 4
          %s330 = int_to_ptr.vmem [resolvable:$true] %s329
          %335 = dma.hbm_to_vmem [thread:$0]  %s328, 256, %s330, %s317, 64, 64, 4
        $region44: #{tpu_custom_call.1} parent=39 // pred_fallthru
          _
        // Predicated region
        $region45: #{tpu_custom_call.1} parent=39 // pred_check
          %p336 = pneg %p86
        $region46: #{tpu_custom_call.1} parent=39 // pred_check_branch
          %338 = sbr.rel (%p336) target = $region48
        $region47: #{tpu_custom_call.1} parent=39 // pred_region
          %s339 = sand.u32 %s24, 1
          %s340 = scalar_lea.sflag [#allocation7], %s339
          %s341 = sand.u32 %s76, 1
          %s342 = smul.addr %s341, 8
          %s343 = scalar_lea.vmem [#allocation6], %s342
          %s345 = ssub.s32 128, 128
          %346 = vsyncadd %s340, %s345
          %s347 = smul.addr %s32, 2
          %s348 = smul.addr %s31, 4
          %s349 = sadd.s32 %s347, %s348
          %s350 = smul.addr %s349, 64
          %s351 = scalar_lea.hbm %s1, %s350
          %s352 = sshll.u32 %s343, 4
          %s353 = int_to_ptr.vmem [resolvable:$true] %s352
          %358 = dma.hbm_to_vmem [thread:$0]  %s351, 128, %s353, %s340, 64, 64, 4
        $region48: #{tpu_custom_call.1} parent=39 // pred_fallthru
          _
      $region40: #{tpu_custom_call.1} parent=5 // pred_fallthru
        _
      %p359 = scmp.le.s32.totalorder 1, %s24
      %p360 = scmp.lt.s32.totalorder %s24, 5
      %p361 = pnand %p359, %p360
      %p362 = pneg %p361
      // Predicated region
      $region49: #{tpu_custom_call.1} parent=5 // pred_check
        _
      $region50: #{tpu_custom_call.1} parent=5 // pred_check_branch
        %364 = sbr.rel (%p361) target = $region52
      $region51: #{tpu_custom_call.1} parent=5 // pred_region
        %s365 = ssub.s32 %s24, 1
        %s366 = sand.u32 %s51, 1
        %s367 = scalar_lea.sflag [#allocation4], %s366
        %s368 = sand.u32 %s51, 1
        %s369 = smul.addr %s368, 16
        %s370 = scalar_lea.vmem [#allocation3], %s369
        // Predicated region
        $region53: #{tpu_custom_call.1} parent=51 // pred_check
          %p371 = pneg %p64
        $region54: #{tpu_custom_call.1} parent=51 // pred_check_branch
          %373 = sbr.rel (%p371) target = $region56
        $region55: #{tpu_custom_call.1} parent=51 // pred_region
          %374 = dma.done %s367, 256
        $region56: #{tpu_custom_call.1} parent=51 // pred_fallthru
          _
        %s375 = sand.u32 %s29, 1
        %s376 = scalar_lea.sflag [#allocation7], %s375
        %s377 = sand.u32 %s79, 1
        %s378 = smul.addr %s377, 8
        %s379 = scalar_lea.vmem [#allocation6], %s378
        // Predicated region
        $region57: #{tpu_custom_call.1} parent=51 // pred_check
          %p380 = pneg %p92
        $region58: #{tpu_custom_call.1} parent=51 // pred_check_branch
          %382 = sbr.rel (%p380) target = $region60
        $region59: #{tpu_custom_call.1} parent=51 // pred_region
          %383 = dma.done %s376, 128
        $region60: #{tpu_custom_call.1} parent=51 // pred_fallthru
          _
        // Predicated region
        $region61: #{tpu_custom_call.1} parent=51 // pred_check
          %p384 = pneg %p113
        $region62: #{tpu_custom_call.1} parent=51 // pred_check_branch
          %386 = sbr.rel (%p384) target = $region64
        $region63: #{tpu_custom_call.1} parent=51 // pred_region
          %387 = dma.done [#allocation7], 1024
        $region64: #{tpu_custom_call.1} parent=51 // pred_fallthru
          _
        // Predicated region
        $region65: #{tpu_custom_call.1} parent=51 // pred_check
          %p388 = pneg %p155
        $region66: #{tpu_custom_call.1} parent=51 // pred_check_branch
          %390 = sbr.rel (%p388) target = $region68
        $region67: #{tpu_custom_call.1} parent=51 // pred_region
          %391 = dma.done [#allocation10], 9216
        $region68: #{tpu_custom_call.1} parent=51 // pred_fallthru
          _
        // Predicated region
        $region69: #{tpu_custom_call.1} parent=51 // pred_check
          %p392 = pneg %p197
        $region70: #{tpu_custom_call.1} parent=51 // pred_check_branch
          %394 = sbr.rel (%p392) target = $region72
        $region71: #{tpu_custom_call.1} parent=51 // pred_region
          %395 = dma.done [#allocation10], 1024
        $region72: #{tpu_custom_call.1} parent=51 // pred_fallthru
          _
        %s396 = sand.u32 %s51, 1
        %s397 = scalar_lea.sflag [#allocation4], %s396
        %s398 = sand.u32 %s51, 1
        %s399 = smul.addr %s398, 16
        %s400 = scalar_lea.vmem [#allocation3], %s399
        %p401 = pneg %p64
        %p402 = pneg %p61
        %s403 = sand.u32 %s29, 1
        %s404 = scalar_lea.sflag [#allocation7], %s403
        %s405 = sand.u32 %s79, 1
        %s406 = smul.addr %s405, 8
        %s407 = scalar_lea.vmem [#allocation6], %s406
        %p408 = pneg %p92
        %p409 = pneg %p89
        %p410 = pneg %p113
        %p411 = pneg %p110
        %p412 = pneg %p134
        %p413 = pneg %p131
        %p414 = pneg %p155
        %p415 = pneg %p152
        %p416 = pneg %p176
        %p417 = pneg %p173
        %p418 = pneg %p197
        %p419 = pneg %p194
        %p420 = pneg %p218
        %p421 = pneg %p215
        %p422 = pneg %p246
        %p423 = pneg %p243
        %s424 = sand.u32 %s233, 1
        %s425 = scalar_lea.sflag [#allocation5], %s424
        %s426 = sand.u32 %s233, 1
        %s427 = smul.addr %s426, 32
        %s428 = scalar_lea.vmem [#allocation12], %s427
        %s429 = smul.u32 4, %s34
        %s430 = smul.u32 4, %s34
        %v432 = vld [vmem:[%s370] sm:$0xf]
        %v433 = vld [vmem:[%s370 + $0x4] sm:$0xf]
        %v434 = vld [vmem:[%s370 + $0x8] sm:$0xf]
        %v435 = vld [vmem:[%s370 + $0xc] sm:$0xf]
        %v436 = vld [vmem:[%s379] sm:$0xf]
        %v437 = vld [vmem:[%s379 + $0x4] sm:$0xf]
        %v438 = vld [vmem:[#allocation8] sm:$0xf]
        %v439 = vld [vmem:[#allocation8 + $0x4] sm:$0xf]
        %v440 = vld [vmem:[#allocation8 + $0x8] sm:$0xf]
        %v441 = vld [vmem:[#allocation8 + $0xc] sm:$0xf]
        %v442 = vld [vmem:[#allocation8 + $0x10] sm:$0xf]
        %v443 = vld [vmem:[#allocation8 + $0x14] sm:$0xf]
        %v444 = vld [vmem:[#allocation8 + $0x18] sm:$0xf]
        %v445 = vld [vmem:[#allocation8 + $0x1c] sm:$0xf]
        %v446 = vld [vmem:[#allocation8 + $0x20] sm:$0xf]
        %v447 = vld [vmem:[#allocation8 + $0x24] sm:$0xf]
        %v448 = vld [vmem:[#allocation8 + $0x28] sm:$0xf]
        %v449 = vld [vmem:[#allocation8 + $0x2c] sm:$0xf]
        %v450 = vld [vmem:[#allocation8 + $0x30] sm:$0xf]
        %v451 = vld [vmem:[#allocation8 + $0x34] sm:$0xf]
        %v452 = vld [vmem:[#allocation8 + $0x38] sm:$0xf]
        %v453 = vld [vmem:[#allocation8 + $0x3c] sm:$0xf]
        %v454 = vld [vmem:[%s3] sm:$0x1]
        %v456 = vlaneseq
        %v457 = vshrl.u32 %v456, 7
        %v458 = vsub.s32 0, %v457
        %v459 = vrot.slane %v454, %v458
        %v465 = vunpack.c.l.b16 %v432
        %v466 = vunpack.c.l.b16 %v433
        %v467 = vunpack.c.l.b16 %v434
        %v468 = vunpack.c.l.b16 %v435
        %v469 = vpack.c.b16 %v466, %v465
        %v470 = vpack.c.b16 %v468, %v467
        %v489 = vunpack.c.l.b16 %v438
        %v490 = vunpack.c.l.b16 %v439
        %v491 = vunpack.c.l.b16 %v440
        %v492 = vunpack.c.l.b16 %v441
        %v493 = vunpack.c.l.b16 %v442
        %v494 = vunpack.c.l.b16 %v443
        %v495 = vunpack.c.l.b16 %v444
        %v496 = vunpack.c.l.b16 %v445
        %v497 = vunpack.c.l.b16 %v446
        %v498 = vunpack.c.l.b16 %v447
        %v499 = vunpack.c.l.b16 %v448
        %v500 = vunpack.c.l.b16 %v449
        %v501 = vunpack.c.l.b16 %v450
        %v502 = vunpack.c.l.b16 %v451
        %v503 = vunpack.c.l.b16 %v452
        %v504 = vunpack.c.l.b16 %v453
        %v505 = vpack.c.b16 %v490, %v489
        %v506 = vpack.c.b16 %v492, %v491
        %v507 = vpack.c.b16 %v494, %v493
        %v508 = vpack.c.b16 %v496, %v495
        %v509 = vpack.c.b16 %v498, %v497
        %v510 = vpack.c.b16 %v500, %v499
        %v511 = vpack.c.b16 %v502, %v501
        %v512 = vpack.c.b16 %v504, %v503
        %521 = vmatprep.subr.bf16.mxu0 0
        %522 = vmatpush1.bf16.msra.mxu0 %v505
        %523 = vmatprep.subr.bf16.mxu0 0
        %524 = vmatpush1.bf16.msra.mxu0 %v506
        %525 = vmatprep.subr.bf16.mxu0 0
        %526 = vmatpush1.bf16.msra.mxu0 %v507
        %527 = vmatprep.subr.bf16.mxu0 0
        %528 = vmatpush1.bf16.msra.mxu0 %v508
        %529 = vmatprep.subr.bf16.mxu0 0
        %530 = vmatpush1.bf16.msra.mxu0 %v509
        %531 = vmatprep.subr.bf16.mxu0 0
        %532 = vmatpush1.bf16.msra.mxu0 %v510
        %533 = vmatprep.subr.bf16.mxu0 0
        %534 = vmatpush1.bf16.msra.mxu0 %v511
        %535 = vmatprep.subr.bf16.mxu0 0
        %536 = vmatpush1.bf16.msra.mxu0 %v512
        %537 = vmatprep.subr.bf16.mxu0 0
        %538 = vmatpush1.bf16.msra.mxu0 0
        %539 = vmatprep.subr.bf16.mxu0 0
        %540 = vmatpush1.bf16.msra.mxu0 0
        %541 = vmatprep.subr.bf16.mxu0 0
        %542 = vmatpush1.bf16.msra.mxu0 0
        %543 = vmatprep.subr.bf16.mxu0 0
        %544 = vmatpush1.bf16.msra.mxu0 0
        %545 = vmatprep.subr.bf16.mxu0 0
        %546 = vmatpush1.bf16.msra.mxu0 0
        %547 = vmatprep.subr.bf16.mxu0 0
        %548 = vmatpush1.bf16.msra.mxu0 0
        %549 = vmatprep.subr.bf16.mxu0 0
        %550 = vmatpush1.bf16.msra.mxu0 0
        %551 = vmatprep.subr.bf16.mxu0 0
        %552 = vmatpush1.bf16.msra.mxu0 0
        %553 = vmatprep.mubr.bf16.mxu0 0
        %554 = vmatmul.mubr.bf16.gmra.mrb[0].mxu0 %v469
        %v555 = vpop.f32.mrb[0].mxu0
        %v556 = vadd.f32 %v459, %v555
        %v557 = vpop.f32.mrb[0].mxu0
        %v558 = vpop.f32.mrb[0].mxu0
        %v559 = vadd.f32 %v459, %v558
        %v560 = vpop.f32.mrb[0].mxu0
        %561 = vmatprep.mubr.bf16.mxu0 0
        %562 = vmatmul.mubr.bf16.gmra.mrb[0].mxu0 %v470
        %v563 = vpop.f32.mrb[0].mxu0
        %v564 = vadd.f32 %v459, %v563
        %v565 = vpop.f32.mrb[0].mxu0
        %v566 = vpop.f32.mrb[0].mxu0
        %v567 = vadd.f32 %v459, %v566
        %v568 = vpop.f32.mrb[0].mxu0
        %569 = vdwg.mxu0
        %v570 = vmax.f32 %v556, 0.0
        %v571 = vmax.f32 %v559, 0.0
        %v572 = vmax.f32 %v564, 0.0
        %v573 = vmax.f32 %v567, 0.0
        %v576 = vunpack.c.l.b16 %v436
        %v577 = vunpack.c.l.b16 %v437
        %v578 = vpack.c.b16 %v577, %v576
        %580 = vmatprep.subr.bf16.mxu0 0
        %581 = vmatpush1.bf16.msra.mxu0 %v505
        %582 = vmatprep.subr.bf16.mxu0 0
        %583 = vmatpush1.bf16.msra.mxu0 %v506
        %584 = vmatprep.subr.bf16.mxu0 0
        %585 = vmatpush1.bf16.msra.mxu0 %v507
        %586 = vmatprep.subr.bf16.mxu0 0
        %587 = vmatpush1.bf16.msra.mxu0 %v508
        %588 = vmatprep.subr.bf16.mxu0 0
        %589 = vmatpush1.bf16.msra.mxu0 %v509
        %590 = vmatprep.subr.bf16.mxu0 0
        %591 = vmatpush1.bf16.msra.mxu0 %v510
        %592 = vmatprep.subr.bf16.mxu0 0
        %593 = vmatpush1.bf16.msra.mxu0 %v511
        %594 = vmatprep.subr.bf16.mxu0 0
        %595 = vmatpush1.bf16.msra.mxu0 %v512
        %596 = vmatprep.subr.bf16.mxu0 0
        %597 = vmatpush1.bf16.msra.mxu0 0
        %598 = vmatprep.subr.bf16.mxu0 0
        %599 = vmatpush1.bf16.msra.mxu0 0
        %600 = vmatprep.subr.bf16.mxu0 0
        %601 = vmatpush1.bf16.msra.mxu0 0
        %602 = vmatprep.subr.bf16.mxu0 0
        %603 = vmatpush1.bf16.msra.mxu0 0
        %604 = vmatprep.subr.bf16.mxu0 0
        %605 = vmatpush1.bf16.msra.mxu0 0
        %606 = vmatprep.subr.bf16.mxu0 0
        %607 = vmatpush1.bf16.msra.mxu0 0
        %608 = vmatprep.subr.bf16.mxu0 0
        %609 = vmatpush1.bf16.msra.mxu0 0
        %610 = vmatprep.subr.bf16.mxu0 0
        %611 = vmatpush1.bf16.msra.mxu0 0
        %612 = vmatprep.mubr.bf16.mxu0 0
        %613 = vmatmul.mubr.bf16.gmra.mrb[0].mxu0 %v578
        %v614 = vpop.f32.mrb[0].mxu0
        %v615 = vadd.f32 %v459, %v614
        %v616 = vpop.f32.mrb[0].mxu0
        %v617 = vpop.f32.mrb[0].mxu0
        %v618 = vadd.f32 %v459, %v617
        %v619 = vpop.f32.mrb[0].mxu0
        %620 = vdwg.mxu0
        %v621 = vmax.f32 %v615, 0.0
        %v622 = vmax.f32 %v618, 0.0
        %p623 = scmp.gt.s32.totalorder %s34, 0
        %s624 = scalar_select %p623, 1, 0
        %s625 = scvt.s32.f32 %s624
        %v626 = vstv %s625
        %v627 = vmul.f32 %v621, %v626
        %s628 = sadd.s32 %s34, 1
        %p629 = scmp.lt.s32.totalorder %s628, 2
        %s630 = scalar_select %p629, 1, 0
        %s631 = scvt.s32.f32 %s630
        %v632 = vstv %s631
        %v633 = vmul.f32 %v622, %v632
        %v634 = vlaneseq
        %v635 = vshrl.u32 %v634, 7
        %vm636 = vcmp.lt.s32.totalorder %v635, 0
        %v637 = vsub.s32 0, %v635
        %v638 = vsel %vm636, %v637, %v635
        %v639 = vshrl.u32 %v638, 3
        %v640 = vand.u32 %v638, 7
        %v641 = vsub.s32 0, %v640
        %v642 = vsel %vm636, %v641, %v640
        %vm643 = vcmp.ne.s32.totalorder %v642, 0
        %vm644 = vcmp.lt.s32.totalorder %v642, 0
        %vm645 = vmand %vm644, %vm643
        %v646 = vadd.s32 %v642, 8
        %v647 = vsel %vm645, %v646, %v642
        %vm648 = vcmp.gt.s32.totalorder %v647, 0
        %v650 = vrot.slane %v627, 7
        %vm652 = vcmask 1040384
        %v653 = vsel %vm652, %v650, %v650
        %v654 = vsel %vm648, 1, 0
        %vm655 = vcmp.eq.s32.totalorder %v654, 1
        %v656 = vsel %vm655, %v653, 0.0
        %vm657 = vcmp.lt.s32.totalorder %v647, 7
        %v658 = vrot.slane %v627, 1
        %vm660 = vcmask 1046528
        %v661 = vsel %vm660, %v658, %v658
        %v662 = vsel %vm657, 1, 0
        %vm663 = vcmp.eq.s32.totalorder %v662, 1
        %v664 = vsel %vm663, %v661, 0.0
        %v665 = vpack.c.bf16 %v656, %v656
        %666 = vst [vmem:[#allocation2] sm:$0xf] %v665
        %v667 = vpack.c.bf16 %v627, %v627
        %668 = vst [vmem:[#allocation2 + $0x8] sm:$0xf] %v667
        %v669 = vpack.c.bf16 %v664, %v664
        %670 = vst [vmem:[#allocation2 + $0x10] sm:$0xf] %v669
        %v671 = vadd.s32 %v635, 8
        %v672 = vadd.s32 %v635, 16
        %v673 = vadd.s32 %v635, 24
        %vm674 = vcmp.lt.s32.totalorder %v671, 0
        %v675 = vsub.s32 0, %v671
        %v676 = vsel %vm674, %v675, %v671
        %v677 = vshrl.u32 %v676, 3
        %v678 = vand.u32 %v676, 7
        %v679 = vsub.s32 0, %v678
        %v680 = vsel %vm674, %v679, %v678
        %vm681 = vcmp.lt.s32.totalorder %v672, 0
        %v682 = vsub.s32 0, %v672
        %v683 = vsel %vm681, %v682, %v672
        %v684 = vshrl.u32 %v683, 3
        %v685 = vand.u32 %v683, 7
        %v686 = vsub.s32 0, %v685
        %v687 = vsel %vm681, %v686, %v685
        %vm688 = vcmp.lt.s32.totalorder %v673, 0
        %v689 = vsub.s32 0, %v673
        %v690 = vsel %vm688, %v689, %v673
        %v691 = vshrl.u32 %v690, 3
        %v692 = vand.u32 %v690, 7
        %v693 = vsub.s32 0, %v692
        %v694 = vsel %vm688, %v693, %v692
        %vm695 = vcmp.ne.s32.totalorder %v680, 0
        %vm696 = vcmp.ne.s32.totalorder %v687, 0
        %vm697 = vcmp.ne.s32.totalorder %v694, 0
        %vm698 = vcmp.lt.s32.totalorder %v680, 0
        %vm699 = vcmp.lt.s32.totalorder %v687, 0
        %vm700 = vcmp.lt.s32.totalorder %v694, 0
        %vm701 = vmand %vm698, %vm695
        %vm702 = vmand %vm699, %vm696
        %vm703 = vmand %vm700, %vm697
        %v704 = vadd.s32 %v680, 8
        %v705 = vadd.s32 %v687, 8
        %v706 = vadd.s32 %v694, 8
        %v707 = vsel %vm701, %v704, %v680
        %v708 = vsel %vm702, %v705, %v687
        %v709 = vsel %vm703, %v706, %v694
        %vm710 = vcmp.gt.s32.totalorder %v707, 0
        %vm711 = vcmp.gt.s32.totalorder %v708, 0
        %vm712 = vcmp.gt.s32.totalorder %v709, 0
        %v714 = vrot.slane %v573, 7
        %v719 = vrot.slane %v570, 7
        %v720 = vrot.slane %v571, 7
        %v721 = vsel %vm652, %v719, %v720
        %v722 = vrot.slane %v572, 7
        %v723 = vsel %vm652, %v720, %v722
        %v724 = vsel %vm652, %v722, %v714
        %v729 = vsel %vm652, %v714, %v719
        %v730 = vsel %vm710, 1, 0
        %v731 = vsel %vm711, 1, 0
        %v732 = vsel %vm712, 1, 0
        %vm733 = vcmp.eq.s32.totalorder %v730, 1
        %vm734 = vcmp.eq.s32.totalorder %v731, 1
        %vm735 = vcmp.eq.s32.totalorder %v732, 1
        %v736 = vsel %vm655, %v729, 0.0
        %v737 = vsel %vm733, %v721, 0.0
        %v738 = vsel %vm734, %v723, 0.0
        %v739 = vsel %vm735, %v724, 0.0
        %vm740 = vcmp.lt.s32.totalorder %v707, 7
        %vm741 = vcmp.lt.s32.totalorder %v708, 7
        %vm742 = vcmp.lt.s32.totalorder %v709, 7
        %v743 = vrot.slane %v570, 1
        %v744 = vrot.slane %v571, 1
        %v745 = vsel %vm660, %v743, %v744
        %v746 = vrot.slane %v572, 1
        %v747 = vsel %vm660, %v744, %v746
        %v748 = vrot.slane %v573, 1
        %v749 = vsel %vm660, %v746, %v748
        %v755 = vsel %vm660, %v748, %v743
        %v756 = vsel %vm740, 1, 0
        %v757 = vsel %vm741, 1, 0
        %v758 = vsel %vm742, 1, 0
        %vm759 = vcmp.eq.s32.totalorder %v756, 1
        %vm760 = vcmp.eq.s32.totalorder %v757, 1
        %vm761 = vcmp.eq.s32.totalorder %v758, 1
        %v762 = vsel %vm663, %v745, 0.0
        %v763 = vsel %vm759, %v747, 0.0
        %v764 = vsel %vm760, %v749, 0.0
        %v765 = vsel %vm761, %v755, 0.0
        %v766 = vpack.c.bf16 %v737, %v736
        %v767 = vpack.c.bf16 %v739, %v738
        %vm770 = vcmask 1043456
        %v771 = vrot.slane %v766, 4
        %v772 = vrot.slane %v767, 4
        %v773 = vsel %vm770, %v771, %v772
        %777 = vst [vmem:[#allocation2] sm:$0xf0] %v771
        %778 = vst [vmem:[#allocation2 + $0x18] sm:$0xff] %v773
        %779 = vst [vmem:[#allocation2 + $0x30] sm:$0xf] %v772
        %v780 = vpack.c.bf16 %v571, %v570
        %v781 = vpack.c.bf16 %v573, %v572
        %v784 = vrot.slane %v780, 4
        %v785 = vrot.slane %v781, 4
        %v786 = vsel %vm770, %v784, %v785
        %790 = vst [vmem:[#allocation2 + $0x8] sm:$0xf0] %v784
        %791 = vst [vmem:[#allocation2 + $0x20] sm:$0xff] %v786
        %792 = vst [vmem:[#allocation2 + $0x38] sm:$0xf] %v785
        %v793 = vpack.c.bf16 %v763, %v762
        %v794 = vpack.c.bf16 %v765, %v764
        %v797 = vrot.slane %v793, 4
        %v798 = vrot.slane %v794, 4
        %v799 = vsel %vm770, %v797, %v798
        %803 = vst [vmem:[#allocation2 + $0x10] sm:$0xf0] %v797
        %804 = vst [vmem:[#allocation2 + $0x28] sm:$0xff] %v799
        %805 = vst [vmem:[#allocation2 + $0x40] sm:$0xf] %v798
        %v807 = vrot.slane %v633, 7
        %v809 = vsel %vm652, %v807, %v807
        %v810 = vsel %vm655, %v809, 0.0
        %v811 = vrot.slane %v633, 1
        %v813 = vsel %vm660, %v811, %v811
        %v814 = vsel %vm663, %v813, 0.0
        %v815 = vpack.c.bf16 %v810, %v810
        %v817 = vrot.slane %v815, 4
        %819 = vst [vmem:[#allocation2 + $0x30] sm:$0xf0] %v817
        %v820 = vpack.c.bf16 %v633, %v633
        %v822 = vrot.slane %v820, 4
        %824 = vst [vmem:[#allocation2 + $0x38] sm:$0xf0] %v822
        %v825 = vpack.c.bf16 %v814, %v814
        %v827 = vrot.slane %v825, 4
        %829 = vst [vmem:[#allocation2 + $0x40] sm:$0xf0] %v827
        %v830 = vld [vmem:[#allocation2] sm:$0xff]
        %v831 = vld [vmem:[#allocation2 + $0x8] sm:$0xff]
        %v832 = vld [vmem:[#allocation2 + $0x10] sm:$0xff]
        %v833 = vld [vmem:[#allocation2 + $0x18] sm:$0xff]
        %v834 = vld [vmem:[#allocation2 + $0x20] sm:$0xff]
        %v835 = vld [vmem:[#allocation2 + $0x28] sm:$0xff]
        %v836 = vld [vmem:[#allocation9] sm:$0xf]
        %v837 = vld [vmem:[#allocation9 + $0x4] sm:$0xf]
        %v838 = vld [vmem:[#allocation9 + $0x8] sm:$0xf]
        %v839 = vld [vmem:[#allocation9 + $0xc] sm:$0xf]
        %v840 = vld [vmem:[#allocation9 + $0x10] sm:$0xf]
        %v841 = vld [vmem:[#allocation9 + $0x14] sm:$0xf]
        %v842 = vld [vmem:[#allocation9 + $0x18] sm:$0xf]
        %v843 = vld [vmem:[#allocation9 + $0x1c] sm:$0xf]
        %v844 = vld [vmem:[#allocation9 + $0x20] sm:$0xf]
        %v845 = vld [vmem:[#allocation9 + $0x24] sm:$0xf]
        %v846 = vld [vmem:[#allocation9 + $0x28] sm:$0xf]
        %v847 = vld [vmem:[#allocation9 + $0x2c] sm:$0xf]
        %v848 = vld [vmem:[#allocation9 + $0x30] sm:$0xf]
        %v849 = vld [vmem:[#allocation9 + $0x34] sm:$0xf]
        %v850 = vld [vmem:[#allocation9 + $0x38] sm:$0xf]
        %v851 = vld [vmem:[#allocation9 + $0x3c] sm:$0xf]
        %v852 = vld [vmem:[#allocation9 + $0x40] sm:$0xf]
        %v853 = vld [vmem:[#allocation9 + $0x44] sm:$0xf]
        %v854 = vld [vmem:[#allocation9 + $0x48] sm:$0xf]
        %v855 = vld [vmem:[#allocation9 + $0x4c] sm:$0xf]
        %v856 = vld [vmem:[#allocation9 + $0x50] sm:$0xf]
        %v857 = vld [vmem:[#allocation9 + $0x54] sm:$0xf]
        %v858 = vld [vmem:[#allocation9 + $0x58] sm:$0xf]
        %v859 = vld [vmem:[#allocation9 + $0x5c] sm:$0xf]
        %v860 = vld [vmem:[#allocation9 + $0x60] sm:$0xf]
        %v861 = vld [vmem:[#allocation9 + $0x64] sm:$0xf]
        %v862 = vld [vmem:[#allocation9 + $0x68] sm:$0xf]
        %v863 = vld [vmem:[#allocation9 + $0x6c] sm:$0xf]
        %v864 = vld [vmem:[#allocation9 + $0x70] sm:$0xf]
        %v865 = vld [vmem:[#allocation9 + $0x74] sm:$0xf]
        %v866 = vld [vmem:[#allocation9 + $0x78] sm:$0xf]
        %v867 = vld [vmem:[#allocation9 + $0x7c] sm:$0xf]
        %v868 = vld [vmem:[#allocation9 + $0x80] sm:$0xf]
        %v869 = vld [vmem:[#allocation9 + $0x84] sm:$0xf]
        %v870 = vld [vmem:[#allocation9 + $0x88] sm:$0xf]
        %v871 = vld [vmem:[#allocation9 + $0x8c] sm:$0xf]
        %v872 = vld [vmem:[#allocation9 + $0x90] sm:$0xf]
        %v873 = vld [vmem:[#allocation9 + $0x94] sm:$0xf]
        %v874 = vld [vmem:[#allocation9 + $0x98] sm:$0xf]
        %v875 = vld [vmem:[#allocation9 + $0x9c] sm:$0xf]
        %v876 = vld [vmem:[#allocation9 + $0xa0] sm:$0xf]
        %v877 = vld [vmem:[#allocation9 + $0xa4] sm:$0xf]
        %v878 = vld [vmem:[#allocation9 + $0xa8] sm:$0xf]
        %v879 = vld [vmem:[#allocation9 + $0xac] sm:$0xf]
        %v880 = vld [vmem:[#allocation9 + $0xb0] sm:$0xf]
        %v881 = vld [vmem:[#allocation9 + $0xb4] sm:$0xf]
        %v882 = vld [vmem:[#allocation9 + $0xb8] sm:$0xf]
        %v883 = vld [vmem:[#allocation9 + $0xbc] sm:$0xf]
        %v884 = vld [vmem:[#allocation2] sm:$0xf0]
        %v885 = vld [vmem:[#allocation2 + $0x8] sm:$0xf0]
        %v886 = vld [vmem:[#allocation2 + $0x10] sm:$0xf0]
        %v887 = vld [vmem:[#allocation2 + $0x18] sm:$0xff]
        %v888 = vld [vmem:[#allocation2 + $0x20] sm:$0xff]
        %v889 = vld [vmem:[#allocation2 + $0x28] sm:$0xff]
        %v890 = vld [vmem:[#allocation2 + $0x30] sm:$0xf]
        %v891 = vld [vmem:[#allocation2 + $0x38] sm:$0xf]
        %v892 = vld [vmem:[#allocation2 + $0x40] sm:$0xf]
        %s893 = scalar_lea.vmem [#allocation9], 192
        %v894 = vld [vmem:[%s893] sm:$0xf]
        %v895 = vld [vmem:[%s893 + $0x4] sm:$0xf]
        %v896 = vld [vmem:[%s893 + $0x8] sm:$0xf]
        %v897 = vld [vmem:[%s893 + $0xc] sm:$0xf]
        %v898 = vld [vmem:[%s893 + $0x10] sm:$0xf]
        %v899 = vld [vmem:[%s893 + $0x14] sm:$0xf]
        %v900 = vld [vmem:[%s893 + $0x18] sm:$0xf]
        %v901 = vld [vmem:[%s893 + $0x1c] sm:$0xf]
        %v902 = vld [vmem:[%s893 + $0x20] sm:$0xf]
        %v903 = vld [vmem:[%s893 + $0x24] sm:$0xf]
        %v904 = vld [vmem:[%s893 + $0x28] sm:$0xf]
        %v905 = vld [vmem:[%s893 + $0x2c] sm:$0xf]
        %v906 = vld [vmem:[%s893 + $0x30] sm:$0xf]
        %v907 = vld [vmem:[%s893 + $0x34] sm:$0xf]
        %v908 = vld [vmem:[%s893 + $0x38] sm:$0xf]
        %v909 = vld [vmem:[%s893 + $0x3c] sm:$0xf]
        %v910 = vld [vmem:[%s893 + $0x40] sm:$0xf]
        %v911 = vld [vmem:[%s893 + $0x44] sm:$0xf]
        %v912 = vld [vmem:[%s893 + $0x48] sm:$0xf]
        %v913 = vld [vmem:[%s893 + $0x4c] sm:$0xf]
        %v914 = vld [vmem:[%s893 + $0x50] sm:$0xf]
        %v915 = vld [vmem:[%s893 + $0x54] sm:$0xf]
        %v916 = vld [vmem:[%s893 + $0x58] sm:$0xf]
        %v917 = vld [vmem:[%s893 + $0x5c] sm:$0xf]
        %v918 = vld [vmem:[%s893 + $0x60] sm:$0xf]
        %v919 = vld [vmem:[%s893 + $0x64] sm:$0xf]
        %v920 = vld [vmem:[%s893 + $0x68] sm:$0xf]
        %v921 = vld [vmem:[%s893 + $0x6c] sm:$0xf]
        %v922 = vld [vmem:[%s893 + $0x70] sm:$0xf]
        %v923 = vld [vmem:[%s893 + $0x74] sm:$0xf]
        %v924 = vld [vmem:[%s893 + $0x78] sm:$0xf]
        %v925 = vld [vmem:[%s893 + $0x7c] sm:$0xf]
        %v926 = vld [vmem:[%s893 + $0x80] sm:$0xf]
        %v927 = vld [vmem:[%s893 + $0x84] sm:$0xf]
        %v928 = vld [vmem:[%s893 + $0x88] sm:$0xf]
        %v929 = vld [vmem:[%s893 + $0x8c] sm:$0xf]
        %v930 = vld [vmem:[%s893 + $0x90] sm:$0xf]
        %v931 = vld [vmem:[%s893 + $0x94] sm:$0xf]
        %v932 = vld [vmem:[%s893 + $0x98] sm:$0xf]
        %v933 = vld [vmem:[%s893 + $0x9c] sm:$0xf]
        %v934 = vld [vmem:[%s893 + $0xa0] sm:$0xf]
        %v935 = vld [vmem:[%s893 + $0xa4] sm:$0xf]
        %v936 = vld [vmem:[%s893 + $0xa8] sm:$0xf]
        %v937 = vld [vmem:[%s893 + $0xac] sm:$0xf]
        %v938 = vld [vmem:[%s893 + $0xb0] sm:$0xf]
        %v939 = vld [vmem:[%s893 + $0xb4] sm:$0xf]
        %v940 = vld [vmem:[%s893 + $0xb8] sm:$0xf]
        %v941 = vld [vmem:[%s893 + $0xbc] sm:$0xf]
        %v951 = vrot.slane %v884, 4
        %v952 = vrot.slane %v887, 4
        %v953 = vsel %vm770, %v951, %v952
        %v954 = vrot.slane %v885, 4
        %v955 = vrot.slane %v888, 4
        %v956 = vsel %vm770, %v954, %v955
        %v957 = vrot.slane %v886, 4
        %v958 = vrot.slane %v889, 4
        %v959 = vsel %vm770, %v957, %v958
        %v960 = vrot.slane %v890, 4
        %v961 = vsel %vm770, %v952, %v960
        %v962 = vrot.slane %v891, 4
        %v963 = vsel %vm770, %v955, %v962
        %v964 = vrot.slane %v892, 4
        %v965 = vsel %vm770, %v958, %v964
        %v1020 = vunpack.c.l.b16 %v894
        %v1021 = vunpack.c.l.b16 %v895
        %v1022 = vunpack.c.l.b16 %v896
        %v1023 = vunpack.c.l.b16 %v897
        %v1024 = vunpack.c.l.b16 %v898
        %v1025 = vunpack.c.l.b16 %v899
        %v1026 = vunpack.c.l.b16 %v900
        %v1027 = vunpack.c.l.b16 %v901
        %v1028 = vunpack.c.l.b16 %v902
        %v1029 = vunpack.c.l.b16 %v903
        %v1030 = vunpack.c.l.b16 %v904
        %v1031 = vunpack.c.l.b16 %v905
        %v1032 = vunpack.c.l.b16 %v906
        %v1033 = vunpack.c.l.b16 %v907
        %v1034 = vunpack.c.l.b16 %v908
        %v1035 = vunpack.c.l.b16 %v909
        %v1036 = vunpack.c.l.b16 %v910
        %v1037 = vunpack.c.l.b16 %v911
        %v1038 = vunpack.c.l.b16 %v912
        %v1039 = vunpack.c.l.b16 %v913
        %v1040 = vunpack.c.l.b16 %v914
        %v1041 = vunpack.c.l.b16 %v915
        %v1042 = vunpack.c.l.b16 %v916
        %v1043 = vunpack.c.l.b16 %v917
        %v1044 = vunpack.c.l.b16 %v918
        %v1045 = vunpack.c.l.b16 %v919
        %v1046 = vunpack.c.l.b16 %v920
        %v1047 = vunpack.c.l.b16 %v921
        %v1048 = vunpack.c.l.b16 %v922
        %v1049 = vunpack.c.l.b16 %v923
        %v1050 = vunpack.c.l.b16 %v924
        %v1051 = vunpack.c.l.b16 %v925
        %v1052 = vunpack.c.l.b16 %v926
        %v1053 = vunpack.c.l.b16 %v927
        %v1054 = vunpack.c.l.b16 %v928
        %v1055 = vunpack.c.l.b16 %v929
        %v1056 = vunpack.c.l.b16 %v930
        %v1057 = vunpack.c.l.b16 %v931
        %v1058 = vunpack.c.l.b16 %v932
        %v1059 = vunpack.c.l.b16 %v933
        %v1060 = vunpack.c.l.b16 %v934
        %v1061 = vunpack.c.l.b16 %v935
        %v1062 = vunpack.c.l.b16 %v936
        %v1063 = vunpack.c.l.b16 %v937
        %v1064 = vunpack.c.l.b16 %v938
        %v1065 = vunpack.c.l.b16 %v939
        %v1066 = vunpack.c.l.b16 %v940
        %v1067 = vunpack.c.l.b16 %v941
        %v1068 = vpack.c.b16 %v1021, %v1020
        %v1069 = vpack.c.b16 %v1023, %v1022
        %v1070 = vpack.c.b16 %v1025, %v1024
        %v1071 = vpack.c.b16 %v1027, %v1026
        %v1072 = vpack.c.b16 %v1029, %v1028
        %v1073 = vpack.c.b16 %v1031, %v1030
        %v1074 = vpack.c.b16 %v1033, %v1032
        %v1075 = vpack.c.b16 %v1035, %v1034
        %v1076 = vpack.c.b16 %v1037, %v1036
        %v1077 = vpack.c.b16 %v1039, %v1038
        %v1078 = vpack.c.b16 %v1041, %v1040
        %v1079 = vpack.c.b16 %v1043, %v1042
        %v1080 = vpack.c.b16 %v1045, %v1044
        %v1081 = vpack.c.b16 %v1047, %v1046
        %v1082 = vpack.c.b16 %v1049, %v1048
        %v1083 = vpack.c.b16 %v1051, %v1050
        %v1084 = vpack.c.b16 %v1053, %v1052
        %v1085 = vpack.c.b16 %v1055, %v1054
        %v1086 = vpack.c.b16 %v1057, %v1056
        %v1087 = vpack.c.b16 %v1059, %v1058
        %v1088 = vpack.c.b16 %v1061, %v1060
        %v1089 = vpack.c.b16 %v1063, %v1062
        %v1090 = vpack.c.b16 %v1065, %v1064
        %v1091 = vpack.c.b16 %v1067, %v1066
        %1116 = vmatprep.subr.bf16.mxu0 0
        %1117 = vmatpush1.bf16.msra.mxu0 %v1068
        %1118 = vmatprep.subr.bf16.mxu0 0
        %1119 = vmatpush1.bf16.msra.mxu0 %v1069
        %1120 = vmatprep.subr.bf16.mxu0 0
        %1121 = vmatpush1.bf16.msra.mxu0 %v1070
        %1122 = vmatprep.subr.bf16.mxu0 0
        %1123 = vmatpush1.bf16.msra.mxu0 %v1071
        %1124 = vmatprep.subr.bf16.mxu0 0
        %1125 = vmatpush1.bf16.msra.mxu0 %v1072
        %1126 = vmatprep.subr.bf16.mxu0 0
        %1127 = vmatpush1.bf16.msra.mxu0 %v1073
        %1128 = vmatprep.subr.bf16.mxu0 0
        %1129 = vmatpush1.bf16.msra.mxu0 %v1074
        %1130 = vmatprep.subr.bf16.mxu0 0
        %1131 = vmatpush1.bf16.msra.mxu0 %v1075
        %1132 = vmatprep.subr.bf16.mxu0 0
        %1133 = vmatpush1.bf16.msra.mxu0 %v1076
        %1134 = vmatprep.subr.bf16.mxu0 0
        %1135 = vmatpush1.bf16.msra.mxu0 %v1077
        %1136 = vmatprep.subr.bf16.mxu0 0
        %1137 = vmatpush1.bf16.msra.mxu0 %v1078
        %1138 = vmatprep.subr.bf16.mxu0 0
        %1139 = vmatpush1.bf16.msra.mxu0 %v1079
        %1140 = vmatprep.subr.bf16.mxu0 0
        %1141 = vmatpush1.bf16.msra.mxu0 %v1080
        %1142 = vmatprep.subr.bf16.mxu0 0
        %1143 = vmatpush1.bf16.msra.mxu0 %v1081
        %1144 = vmatprep.subr.bf16.mxu0 0
        %1145 = vmatpush1.bf16.msra.mxu0 %v1082
        %1146 = vmatprep.subr.bf16.mxu0 0
        %1147 = vmatpush1.bf16.msra.mxu0 %v1083
        %1148 = vmatprep.mubr.bf16.mxu0 %v956
        %1149 = vmatmul.mubr.bf16.gmra.mrb[0].mxu0 %v953
        %v1150 = vpop.f32.mrb[0].mxu0
        %v1151 = vadd.f32 0.0, %v1150
        %v1152 = vpop.f32.mrb[0].mxu0
        %v1153 = vpop.f32.mrb[0].mxu0
        %v1154 = vadd.f32 0.0, %v1153
        %v1155 = vpop.f32.mrb[0].mxu0
        %1156 = vmatprep.mubr.bf16.mxu0 %v963
        %1157 = vmatmul.mubr.bf16.gmra.mrb[0].mxu0 %v961
        %v1158 = vpop.f32.mrb[0].mxu0
        %v1159 = vadd.f32 0.0, %v1158
        %v1160 = vpop.f32.mrb[0].mxu0
        %v1161 = vpop.f32.mrb[0].mxu0
        %v1162 = vadd.f32 0.0, %v1161
        %v1163 = vpop.f32.mrb[0].mxu0
        %1164 = vdwg.mxu0
        %1165 = vmatprep.subr.bf16.mxu0 0
        %1166 = vmatpush1.bf16.msra.mxu0 %v1084
        %1167 = vmatprep.subr.bf16.mxu0 0
        %1168 = vmatpush1.bf16.msra.mxu0 %v1085
        %1169 = vmatprep.subr.bf16.mxu0 0
        %1170 = vmatpush1.bf16.msra.mxu0 %v1086
        %1171 = vmatprep.subr.bf16.mxu0 0
        %1172 = vmatpush1.bf16.msra.mxu0 %v1087
        %1173 = vmatprep.subr.bf16.mxu0 0
        %1174 = vmatpush1.bf16.msra.mxu0 %v1088
        %1175 = vmatprep.subr.bf16.mxu0 0
        %1176 = vmatpush1.bf16.msra.mxu0 %v1089
        %1177 = vmatprep.subr.bf16.mxu0 0
        %1178 = vmatpush1.bf16.msra.mxu0 %v1090
        %1179 = vmatprep.subr.bf16.mxu0 0
        %1180 = vmatpush1.bf16.msra.mxu0 %v1091
        %1181 = vmatprep.subr.bf16.mxu0 0
        %1182 = vmatpush1.bf16.msra.mxu0 0
        %1183 = vmatprep.subr.bf16.mxu0 0
        %1184 = vmatpush1.bf16.msra.mxu0 0
        %1185 = vmatprep.subr.bf16.mxu0 0
        %1186 = vmatpush1.bf16.msra.mxu0 0
        %1187 = vmatprep.subr.bf16.mxu0 0
        %1188 = vmatpush1.bf16.msra.mxu0 0
        %1189 = vmatprep.subr.bf16.mxu0 0
        %1190 = vmatpush1.bf16.msra.mxu0 0
        %1191 = vmatprep.subr.bf16.mxu0 0
        %1192 = vmatpush1.bf16.msra.mxu0 0
        %1193 = vmatprep.subr.bf16.mxu0 0
        %1194 = vmatpush1.bf16.msra.mxu0 0
        %1195 = vmatprep.subr.bf16.mxu0 0
        %1196 = vmatpush1.bf16.msra.mxu0 0
        %1197 = vmatprep.mubr.bf16.mxu0 0
        %1198 = vmatmul.mubr.bf16.gmra.mrb[0].mxu0 %v959
        %v1199 = vpop.f32.mrb[0].mxu0
        %v1200 = vadd.f32 %v1151, %v1199
        %v1201 = vpop.f32.mrb[0].mxu0
        %v1202 = vpop.f32.mrb[0].mxu0
        %v1203 = vadd.f32 %v1154, %v1202
        %v1204 = vpop.f32.mrb[0].mxu0
        %1205 = vmatprep.mubr.bf16.mxu0 0
        %1206 = vmatmul.mubr.bf16.gmra.mrb[0].mxu0 %v965
        %v1207 = vpop.f32.mrb[0].mxu0
        %v1208 = vadd.f32 %v1159, %v1207
        %v1209 = vpop.f32.mrb[0].mxu0
        %v1210 = vpop.f32.mrb[0].mxu0
        %v1211 = vadd.f32 %v1162, %v1210
        %v1212 = vpop.f32.mrb[0].mxu0
        %1213 = vdwg.mxu0
        %v1262 = vunpack.c.l.b16 %v836
        %v1263 = vunpack.c.l.b16 %v837
        %v1264 = vunpack.c.l.b16 %v838
        %v1265 = vunpack.c.l.b16 %v839
        %v1266 = vunpack.c.l.b16 %v840
        %v1267 = vunpack.c.l.b16 %v841
        %v1268 = vunpack.c.l.b16 %v842
        %v1269 = vunpack.c.l.b16 %v843
        %v1270 = vunpack.c.l.b16 %v844
        %v1271 = vunpack.c.l.b16 %v845
        %v1272 = vunpack.c.l.b16 %v846
        %v1273 = vunpack.c.l.b16 %v847
        %v1274 = vunpack.c.l.b16 %v848
        %v1275 = vunpack.c.l.b16 %v849
        %v1276 = vunpack.c.l.b16 %v850
        %v1277 = vunpack.c.l.b16 %v851
        %v1278 = vunpack.c.l.b16 %v852
        %v1279 = vunpack.c.l.b16 %v853
        %v1280 = vunpack.c.l.b16 %v854
        %v1281 = vunpack.c.l.b16 %v855
        %v1282 = vunpack.c.l.b16 %v856
        %v1283 = vunpack.c.l.b16 %v857
        %v1284 = vunpack.c.l.b16 %v858
        %v1285 = vunpack.c.l.b16 %v859
        %v1286 = vunpack.c.l.b16 %v860
        %v1287 = vunpack.c.l.b16 %v861
        %v1288 = vunpack.c.l.b16 %v862
        %v1289 = vunpack.c.l.b16 %v863
        %v1290 = vunpack.c.l.b16 %v864
        %v1291 = vunpack.c.l.b16 %v865
        %v1292 = vunpack.c.l.b16 %v866
        %v1293 = vunpack.c.l.b16 %v867
        %v1294 = vunpack.c.l.b16 %v868
        %v1295 = vunpack.c.l.b16 %v869
        %v1296 = vunpack.c.l.b16 %v870
        %v1297 = vunpack.c.l.b16 %v871
        %v1298 = vunpack.c.l.b16 %v872
        %v1299 = vunpack.c.l.b16 %v873
        %v1300 = vunpack.c.l.b16 %v874
        %v1301 = vunpack.c.l.b16 %v875
        %v1302 = vunpack.c.l.b16 %v876
        %v1303 = vunpack.c.l.b16 %v877
        %v1304 = vunpack.c.l.b16 %v878
        %v1305 = vunpack.c.l.b16 %v879
        %v1306 = vunpack.c.l.b16 %v880
        %v1307 = vunpack.c.l.b16 %v881
        %v1308 = vunpack.c.l.b16 %v882
        %v1309 = vunpack.c.l.b16 %v883
        %v1310 = vpack.c.b16 %v1263, %v1262
        %v1311 = vpack.c.b16 %v1265, %v1264
        %v1312 = vpack.c.b16 %v1267, %v1266
        %v1313 = vpack.c.b16 %v1269, %v1268
        %v1314 = vpack.c.b16 %v1271, %v1270
        %v1315 = vpack.c.b16 %v1273, %v1272
        %v1316 = vpack.c.b16 %v1275, %v1274
        %v1317 = vpack.c.b16 %v1277, %v1276
        %v1318 = vpack.c.b16 %v1279, %v1278
        %v1319 = vpack.c.b16 %v1281, %v1280
        %v1320 = vpack.c.b16 %v1283, %v1282
        %v1321 = vpack.c.b16 %v1285, %v1284
        %v1322 = vpack.c.b16 %v1287, %v1286
        %v1323 = vpack.c.b16 %v1289, %v1288
        %v1324 = vpack.c.b16 %v1291, %v1290
        %v1325 = vpack.c.b16 %v1293, %v1292
        %v1326 = vpack.c.b16 %v1295, %v1294
        %v1327 = vpack.c.b16 %v1297, %v1296
        %v1328 = vpack.c.b16 %v1299, %v1298
        %v1329 = vpack.c.b16 %v1301, %v1300
        %v1330 = vpack.c.b16 %v1303, %v1302
        %v1331 = vpack.c.b16 %v1305, %v1304
        %v1332 = vpack.c.b16 %v1307, %v1306
        %v1333 = vpack.c.b16 %v1309, %v1308
        %1358 = vmatprep.subr.bf16.mxu0 0
        %1359 = vmatpush1.bf16.msra.mxu0 %v1310
        %1360 = vmatprep.subr.bf16.mxu0 0
        %1361 = vmatpush1.bf16.msra.mxu0 %v1311
        %1362 = vmatprep.subr.bf16.mxu0 0
        %1363 = vmatpush1.bf16.msra.mxu0 %v1312
        %1364 = vmatprep.subr.bf16.mxu0 0
        %1365 = vmatpush1.bf16.msra.mxu0 %v1313
        %1366 = vmatprep.subr.bf16.mxu0 0
        %1367 = vmatpush1.bf16.msra.mxu0 %v1314
        %1368 = vmatprep.subr.bf16.mxu0 0
        %1369 = vmatpush1.bf16.msra.mxu0 %v1315
        %1370 = vmatprep.subr.bf16.mxu0 0
        %1371 = vmatpush1.bf16.msra.mxu0 %v1316
        %1372 = vmatprep.subr.bf16.mxu0 0
        %1373 = vmatpush1.bf16.msra.mxu0 %v1317
        %1374 = vmatprep.subr.bf16.mxu0 0
        %1375 = vmatpush1.bf16.msra.mxu0 %v1318
        %1376 = vmatprep.subr.bf16.mxu0 0
        %1377 = vmatpush1.bf16.msra.mxu0 %v1319
        %1378 = vmatprep.subr.bf16.mxu0 0
        %1379 = vmatpush1.bf16.msra.mxu0 %v1320
        %1380 = vmatprep.subr.bf16.mxu0 0
        %1381 = vmatpush1.bf16.msra.mxu0 %v1321
        %1382 = vmatprep.subr.bf16.mxu0 0
        %1383 = vmatpush1.bf16.msra.mxu0 %v1322
        %1384 = vmatprep.subr.bf16.mxu0 0
        %1385 = vmatpush1.bf16.msra.mxu0 %v1323
        %1386 = vmatprep.subr.bf16.mxu0 0
        %1387 = vmatpush1.bf16.msra.mxu0 %v1324
        %1388 = vmatprep.subr.bf16.mxu0 0
        %1389 = vmatpush1.bf16.msra.mxu0 %v1325
        %1390 = vmatprep.mubr.bf16.mxu0 %v831
        %1391 = vmatmul.mubr.bf16.gmra.mrb[0].mxu0 %v830
        %v1392 = vpop.f32.mrb[0].mxu0
        %v1393 = vadd.f32 %v1200, %v1392
        %v1394 = vpop.f32.mrb[0].mxu0
        %v1395 = vpop.f32.mrb[0].mxu0
        %v1396 = vadd.f32 %v1203, %v1395
        %v1397 = vpop.f32.mrb[0].mxu0
        %1398 = vmatprep.mubr.bf16.mxu0 %v834
        %1399 = vmatmul.mubr.bf16.gmra.mrb[0].mxu0 %v833
        %v1400 = vpop.f32.mrb[0].mxu0
        %v1401 = vadd.f32 %v1208, %v1400
        %v1402 = vpop.f32.mrb[0].mxu0
        %v1403 = vpop.f32.mrb[0].mxu0
        %v1404 = vadd.f32 %v1211, %v1403
        %v1405 = vpop.f32.mrb[0].mxu0
        %1406 = vdwg.mxu0
        %1407 = vmatprep.subr.bf16.mxu0 0
        %1408 = vmatpush1.bf16.msra.mxu0 %v1326
        %1409 = vmatprep.subr.bf16.mxu0 0
        %1410 = vmatpush1.bf16.msra.mxu0 %v1327
        %1411 = vmatprep.subr.bf16.mxu0 0
        %1412 = vmatpush1.bf16.msra.mxu0 %v1328
        %1413 = vmatprep.subr.bf16.mxu0 0
        %1414 = vmatpush1.bf16.msra.mxu0 %v1329
        %1415 = vmatprep.subr.bf16.mxu0 0
        %1416 = vmatpush1.bf16.msra.mxu0 %v1330
        %1417 = vmatprep.subr.bf16.mxu0 0
        %1418 = vmatpush1.bf16.msra.mxu0 %v1331
        %1419 = vmatprep.subr.bf16.mxu0 0
        %1420 = vmatpush1.bf16.msra.mxu0 %v1332
        %1421 = vmatprep.subr.bf16.mxu0 0
        %1422 = vmatpush1.bf16.msra.mxu0 %v1333
        %1423 = vmatprep.subr.bf16.mxu0 0
        %1424 = vmatpush1.bf16.msra.mxu0 0
        %1425 = vmatprep.subr.bf16.mxu0 0
        %1426 = vmatpush1.bf16.msra.mxu0 0
        %1427 = vmatprep.subr.bf16.mxu0 0
        %1428 = vmatpush1.bf16.msra.mxu0 0
        %1429 = vmatprep.subr.bf16.mxu0 0
        %1430 = vmatpush1.bf16.msra.mxu0 0
        %1431 = vmatprep.subr.bf16.mxu0 0
        %1432 = vmatpush1.bf16.msra.mxu0 0
        %1433 = vmatprep.subr.bf16.mxu0 0
        %1434 = vmatpush1.bf16.msra.mxu0 0
        %1435 = vmatprep.subr.bf16.mxu0 0
        %1436 = vmatpush1.bf16.msra.mxu0 0
        %1437 = vmatprep.subr.bf16.mxu0 0
        %1438 = vmatpush1.bf16.msra.mxu0 0
        %1439 = vmatprep.mubr.bf16.mxu0 0
        %1440 = vmatmul.mubr.bf16.gmra.mrb[0].mxu0 %v832
        %v1441 = vpop.f32.mrb[0].mxu0
        %v1442 = vadd.f32 %v1393, %v1441
        %v1443 = vpop.f32.mrb[0].mxu0
        %v1444 = vpop.f32.mrb[0].mxu0
        %v1445 = vadd.f32 %v1396, %v1444
        %v1446 = vpop.f32.mrb[0].mxu0
        %1447 = vmatprep.mubr.bf16.mxu0 0
        %1448 = vmatmul.mubr.bf16.gmra.mrb[0].mxu0 %v835
        %v1449 = vpop.f32.mrb[0].mxu0
        %v1450 = vadd.f32 %v1401, %v1449
        %v1451 = vpop.f32.mrb[0].mxu0
        %v1452 = vpop.f32.mrb[0].mxu0
        %v1453 = vadd.f32 %v1404, %v1452
        %v1454 = vpop.f32.mrb[0].mxu0
        %1455 = vdwg.mxu0
        %v1456 = vld [vmem:[#allocation2 + $0x30] sm:$0xff]
        %v1457 = vld [vmem:[#allocation2 + $0x38] sm:$0xff]
        %v1458 = vld [vmem:[#allocation2 + $0x40] sm:$0xff]
        %s1459 = scalar_lea.vmem [#allocation9], 384
        %v1460 = vld [vmem:[%s1459] sm:$0xf]
        %v1461 = vld [vmem:[%s1459 + $0x4] sm:$0xf]
        %v1462 = vld [vmem:[%s1459 + $0x8] sm:$0xf]
        %v1463 = vld [vmem:[%s1459 + $0xc] sm:$0xf]
        %v1464 = vld [vmem:[%s1459 + $0x10] sm:$0xf]
        %v1465 = vld [vmem:[%s1459 + $0x14] sm:$0xf]
        %v1466 = vld [vmem:[%s1459 + $0x18] sm:$0xf]
        %v1467 = vld [vmem:[%s1459 + $0x1c] sm:$0xf]
        %v1468 = vld [vmem:[%s1459 + $0x20] sm:$0xf]
        %v1469 = vld [vmem:[%s1459 + $0x24] sm:$0xf]
        %v1470 = vld [vmem:[%s1459 + $0x28] sm:$0xf]
        %v1471 = vld [vmem:[%s1459 + $0x2c] sm:$0xf]
        %v1472 = vld [vmem:[%s1459 + $0x30] sm:$0xf]
        %v1473 = vld [vmem:[%s1459 + $0x34] sm:$0xf]
        %v1474 = vld [vmem:[%s1459 + $0x38] sm:$0xf]
        %v1475 = vld [vmem:[%s1459 + $0x3c] sm:$0xf]
        %v1476 = vld [vmem:[%s1459 + $0x40] sm:$0xf]
        %v1477 = vld [vmem:[%s1459 + $0x44] sm:$0xf]
        %v1478 = vld [vmem:[%s1459 + $0x48] sm:$0xf]
        %v1479 = vld [vmem:[%s1459 + $0x4c] sm:$0xf]
        %v1480 = vld [vmem:[%s1459 + $0x50] sm:$0xf]
        %v1481 = vld [vmem:[%s1459 + $0x54] sm:$0xf]
        %v1482 = vld [vmem:[%s1459 + $0x58] sm:$0xf]
        %v1483 = vld [vmem:[%s1459 + $0x5c] sm:$0xf]
        %v1484 = vld [vmem:[%s1459 + $0x60] sm:$0xf]
        %v1485 = vld [vmem:[%s1459 + $0x64] sm:$0xf]
        %v1486 = vld [vmem:[%s1459 + $0x68] sm:$0xf]
        %v1487 = vld [vmem:[%s1459 + $0x6c] sm:$0xf]
        %v1488 = vld [vmem:[%s1459 + $0x70] sm:$0xf]
        %v1489 = vld [vmem:[%s1459 + $0x74] sm:$0xf]
        %v1490 = vld [vmem:[%s1459 + $0x78] sm:$0xf]
        %v1491 = vld [vmem:[%s1459 + $0x7c] sm:$0xf]
        %v1492 = vld [vmem:[%s1459 + $0x80] sm:$0xf]
        %v1493 = vld [vmem:[%s1459 + $0x84] sm:$0xf]
        %v1494 = vld [vmem:[%s1459 + $0x88] sm:$0xf]
        %v1495 = vld [vmem:[%s1459 + $0x8c] sm:$0xf]
        %v1496 = vld [vmem:[%s1459 + $0x90] sm:$0xf]
        %v1497 = vld [vmem:[%s1459 + $0x94] sm:$0xf]
        %v1498 = vld [vmem:[%s1459 + $0x98] sm:$0xf]
        %v1499 = vld [vmem:[%s1459 + $0x9c] sm:$0xf]
        %v1500 = vld [vmem:[%s1459 + $0xa0] sm:$0xf]
        %v1501 = vld [vmem:[%s1459 + $0xa4] sm:$0xf]
        %v1502 = vld [vmem:[%s1459 + $0xa8] sm:$0xf]
        %v1503 = vld [vmem:[%s1459 + $0xac] sm:$0xf]
        %v1504 = vld [vmem:[%s1459 + $0xb0] sm:$0xf]
        %v1505 = vld [vmem:[%s1459 + $0xb4] sm:$0xf]
        %v1506 = vld [vmem:[%s1459 + $0xb8] sm:$0xf]
        %v1507 = vld [vmem:[%s1459 + $0xbc] sm:$0xf]
        %v1556 = vunpack.c.l.b16 %v1460
        %v1557 = vunpack.c.l.b16 %v1461
        %v1558 = vunpack.c.l.b16 %v1462
        %v1559 = vunpack.c.l.b16 %v1463
        %v1560 = vunpack.c.l.b16 %v1464
        %v1561 = vunpack.c.l.b16 %v1465
        %v1562 = vunpack.c.l.b16 %v1466
        %v1563 = vunpack.c.l.b16 %v1467
        %v1564 = vunpack.c.l.b16 %v1468
        %v1565 = vunpack.c.l.b16 %v1469
        %v1566 = vunpack.c.l.b16 %v1470
        %v1567 = vunpack.c.l.b16 %v1471
        %v1568 = vunpack.c.l.b16 %v1472
        %v1569 = vunpack.c.l.b16 %v1473
        %v1570 = vunpack.c.l.b16 %v1474
        %v1571 = vunpack.c.l.b16 %v1475
        %v1572 = vunpack.c.l.b16 %v1476
        %v1573 = vunpack.c.l.b16 %v1477
        %v1574 = vunpack.c.l.b16 %v1478
        %v1575 = vunpack.c.l.b16 %v1479
        %v1576 = vunpack.c.l.b16 %v1480
        %v1577 = vunpack.c.l.b16 %v1481
        %v1578 = vunpack.c.l.b16 %v1482
        %v1579 = vunpack.c.l.b16 %v1483
        %v1580 = vunpack.c.l.b16 %v1484
        %v1581 = vunpack.c.l.b16 %v1485
        %v1582 = vunpack.c.l.b16 %v1486
        %v1583 = vunpack.c.l.b16 %v1487
        %v1584 = vunpack.c.l.b16 %v1488
        %v1585 = vunpack.c.l.b16 %v1489
        %v1586 = vunpack.c.l.b16 %v1490
        %v1587 = vunpack.c.l.b16 %v1491
        %v1588 = vunpack.c.l.b16 %v1492
        %v1589 = vunpack.c.l.b16 %v1493
        %v1590 = vunpack.c.l.b16 %v1494
        %v1591 = vunpack.c.l.b16 %v1495
        %v1592 = vunpack.c.l.b16 %v1496
        %v1593 = vunpack.c.l.b16 %v1497
        %v1594 = vunpack.c.l.b16 %v1498
        %v1595 = vunpack.c.l.b16 %v1499
        %v1596 = vunpack.c.l.b16 %v1500
        %v1597 = vunpack.c.l.b16 %v1501
        %v1598 = vunpack.c.l.b16 %v1502
        %v1599 = vunpack.c.l.b16 %v1503
        %v1600 = vunpack.c.l.b16 %v1504
        %v1601 = vunpack.c.l.b16 %v1505
        %v1602 = vunpack.c.l.b16 %v1506
        %v1603 = vunpack.c.l.b16 %v1507
        %v1604 = vpack.c.b16 %v1557, %v1556
        %v1605 = vpack.c.b16 %v1559, %v1558
        %v1606 = vpack.c.b16 %v1561, %v1560
        %v1607 = vpack.c.b16 %v1563, %v1562
        %v1608 = vpack.c.b16 %v1565, %v1564
        %v1609 = vpack.c.b16 %v1567, %v1566
        %v1610 = vpack.c.b16 %v1569, %v1568
        %v1611 = vpack.c.b16 %v1571, %v1570
        %v1612 = vpack.c.b16 %v1573, %v1572
        %v1613 = vpack.c.b16 %v1575, %v1574
        %v1614 = vpack.c.b16 %v1577, %v1576
        %v1615 = vpack.c.b16 %v1579, %v1578
        %v1616 = vpack.c.b16 %v1581, %v1580
        %v1617 = vpack.c.b16 %v1583, %v1582
        %v1618 = vpack.c.b16 %v1585, %v1584
        %v1619 = vpack.c.b16 %v1587, %v1586
        %v1620 = vpack.c.b16 %v1589, %v1588
        %v1621 = vpack.c.b16 %v1591, %v1590
        %v1622 = vpack.c.b16 %v1593, %v1592
        %v1623 = vpack.c.b16 %v1595, %v1594
        %v1624 = vpack.c.b16 %v1597, %v1596
        %v1625 = vpack.c.b16 %v1599, %v1598
        %v1626 = vpack.c.b16 %v1601, %v1600
        %v1627 = vpack.c.b16 %v1603, %v1602
        %1652 = vmatprep.subr.bf16.mxu0 0
        %1653 = vmatpush1.bf16.msra.mxu0 %v1604
        %1654 = vmatprep.subr.bf16.mxu0 0
        %1655 = vmatpush1.bf16.msra.mxu0 %v1605
        %1656 = vmatprep.subr.bf16.mxu0 0
        %1657 = vmatpush1.bf16.msra.mxu0 %v1606
        %1658 = vmatprep.subr.bf16.mxu0 0
        %1659 = vmatpush1.bf16.msra.mxu0 %v1607
        %1660 = vmatprep.subr.bf16.mxu0 0
        %1661 = vmatpush1.bf16.msra.mxu0 %v1608
        %1662 = vmatprep.subr.bf16.mxu0 0
        %1663 = vmatpush1.bf16.msra.mxu0 %v1609
        %1664 = vmatprep.subr.bf16.mxu0 0
        %1665 = vmatpush1.bf16.msra.mxu0 %v1610
        %1666 = vmatprep.subr.bf16.mxu0 0
        %1667 = vmatpush1.bf16.msra.mxu0 %v1611
        %1668 = vmatprep.subr.bf16.mxu0 0
        %1669 = vmatpush1.bf16.msra.mxu0 %v1612
        %1670 = vmatprep.subr.bf16.mxu0 0
        %1671 = vmatpush1.bf16.msra.mxu0 %v1613
        %1672 = vmatprep.subr.bf16.mxu0 0
        %1673 = vmatpush1.bf16.msra.mxu0 %v1614
        %1674 = vmatprep.subr.bf16.mxu0 0
        %1675 = vmatpush1.bf16.msra.mxu0 %v1615
        %1676 = vmatprep.subr.bf16.mxu0 0
        %1677 = vmatpush1.bf16.msra.mxu0 %v1616
        %1678 = vmatprep.subr.bf16.mxu0 0
        %1679 = vmatpush1.bf16.msra.mxu0 %v1617
        %1680 = vmatprep.subr.bf16.mxu0 0
        %1681 = vmatpush1.bf16.msra.mxu0 %v1618
        %1682 = vmatprep.subr.bf16.mxu0 0
        %1683 = vmatpush1.bf16.msra.mxu0 %v1619
        %1684 = vmatprep.mubr.bf16.mxu0 %v888
        %1685 = vmatmul.mubr.bf16.gmra.mrb[0].mxu0 %v887
        %v1686 = vpop.f32.mrb[0].mxu0
        %v1687 = vadd.f32 0.0, %v1686
        %v1688 = vpop.f32.mrb[0].mxu0
        %v1689 = vpop.f32.mrb[0].mxu0
        %v1690 = vadd.f32 0.0, %v1689
        %v1691 = vpop.f32.mrb[0].mxu0
        %1692 = vmatprep.mubr.bf16.mxu0 %v1457
        %1693 = vmatmul.mubr.bf16.gmra.mrb[0].mxu0 %v1456
        %v1694 = vpop.f32.mrb[0].mxu0
        %v1695 = vadd.f32 0.0, %v1694
        %v1696 = vpop.f32.mrb[0].mxu0
        %v1697 = vpop.f32.mrb[0].mxu0
        %v1698 = vadd.f32 0.0, %v1697
        %v1699 = vpop.f32.mrb[0].mxu0
        %1700 = vdwg.mxu0
        %1701 = vmatprep.subr.bf16.mxu0 0
        %1702 = vmatpush1.bf16.msra.mxu0 %v1620
        %1703 = vmatprep.subr.bf16.mxu0 0
        %1704 = vmatpush1.bf16.msra.mxu0 %v1621
        %1705 = vmatprep.subr.bf16.mxu0 0
        %1706 = vmatpush1.bf16.msra.mxu0 %v1622
        %1707 = vmatprep.subr.bf16.mxu0 0
        %1708 = vmatpush1.bf16.msra.mxu0 %v1623
        %1709 = vmatprep.subr.bf16.mxu0 0
        %1710 = vmatpush1.bf16.msra.mxu0 %v1624
        %1711 = vmatprep.subr.bf16.mxu0 0
        %1712 = vmatpush1.bf16.msra.mxu0 %v1625
        %1713 = vmatprep.subr.bf16.mxu0 0
        %1714 = vmatpush1.bf16.msra.mxu0 %v1626
        %1715 = vmatprep.subr.bf16.mxu0 0
        %1716 = vmatpush1.bf16.msra.mxu0 %v1627
        %1717 = vmatprep.subr.bf16.mxu0 0
        %1718 = vmatpush1.bf16.msra.mxu0 0
        %1719 = vmatprep.subr.bf16.mxu0 0
        %1720 = vmatpush1.bf16.msra.mxu0 0
        %1721 = vmatprep.subr.bf16.mxu0 0
        %1722 = vmatpush1.bf16.msra.mxu0 0
        %1723 = vmatprep.subr.bf16.mxu0 0
        %1724 = vmatpush1.bf16.msra.mxu0 0
        %1725 = vmatprep.subr.bf16.mxu0 0
        %1726 = vmatpush1.bf16.msra.mxu0 0
        %1727 = vmatprep.subr.bf16.mxu0 0
        %1728 = vmatpush1.bf16.msra.mxu0 0
        %1729 = vmatprep.subr.bf16.mxu0 0
        %1730 = vmatpush1.bf16.msra.mxu0 0
        %1731 = vmatprep.subr.bf16.mxu0 0
        %1732 = vmatpush1.bf16.msra.mxu0 0
        %1733 = vmatprep.mubr.bf16.mxu0 0
        %1734 = vmatmul.mubr.bf16.gmra.mrb[0].mxu0 %v889
        %v1735 = vpop.f32.mrb[0].mxu0
        %v1736 = vadd.f32 %v1687, %v1735
        %v1737 = vpop.f32.mrb[0].mxu0
        %v1738 = vpop.f32.mrb[0].mxu0
        %v1739 = vadd.f32 %v1690, %v1738
        %v1740 = vpop.f32.mrb[0].mxu0
        %1741 = vmatprep.mubr.bf16.mxu0 0
        %1742 = vmatmul.mubr.bf16.gmra.mrb[0].mxu0 %v1458
        %v1743 = vpop.f32.mrb[0].mxu0
        %v1744 = vadd.f32 %v1695, %v1743
        %v1745 = vpop.f32.mrb[0].mxu0
        %v1746 = vpop.f32.mrb[0].mxu0
        %v1747 = vadd.f32 %v1698, %v1746
        %v1748 = vpop.f32.mrb[0].mxu0
        %1749 = vdwg.mxu0
        %v1750 = vadd.f32 %v1442, %v1736
        %v1751 = vadd.f32 %v1445, %v1739
        %v1752 = vadd.f32 %v1450, %v1744
        %v1753 = vadd.f32 %v1453, %v1747
        %v1754 = vld [vmem:[%s5] sm:$0x1]
        %v1756 = vlaneseq
        %v1757 = vshrl.u32 %v1756, 7
        %v1758 = vsub.s32 0, %v1757
        %v1759 = vrot.slane %v1754, %v1758
        %v1761 = vadd.f32 %v1750, %v1759
        %v1762 = vadd.f32 %v1751, %v1759
        %v1763 = vadd.f32 %v1752, %v1759
        %v1764 = vadd.f32 %v1753, %v1759
        %v1765 = vmax.f32 %v1761, 0.0
        %v1766 = vmax.f32 %v1762, 0.0
        %v1767 = vmax.f32 %v1763, 0.0
        %v1768 = vmax.f32 %v1764, 0.0
        %v1769 = vpack.c.bf16 %v1766, %v1765
        %v1770 = vpack.c.bf16 %v1768, %v1767
        %v1771 = vld [vmem:[#allocation11] sm:$0xf]
        %v1772 = vld [vmem:[#allocation11 + $0x4] sm:$0xf]
        %v1773 = vld [vmem:[#allocation11 + $0x8] sm:$0xf]
        %v1774 = vld [vmem:[#allocation11 + $0xc] sm:$0xf]
        %v1775 = vld [vmem:[#allocation11 + $0x10] sm:$0xf]
        %v1776 = vld [vmem:[#allocation11 + $0x14] sm:$0xf]
        %v1777 = vld [vmem:[#allocation11 + $0x18] sm:$0xf]
        %v1778 = vld [vmem:[#allocation11 + $0x1c] sm:$0xf]
        %v1779 = vld [vmem:[#allocation11 + $0x20] sm:$0xf]
        %v1780 = vld [vmem:[#allocation11 + $0x24] sm:$0xf]
        %v1781 = vld [vmem:[#allocation11 + $0x28] sm:$0xf]
        %v1782 = vld [vmem:[#allocation11 + $0x2c] sm:$0xf]
        %v1783 = vld [vmem:[#allocation11 + $0x30] sm:$0xf]
        %v1784 = vld [vmem:[#allocation11 + $0x34] sm:$0xf]
        %v1785 = vld [vmem:[#allocation11 + $0x38] sm:$0xf]
        %v1786 = vld [vmem:[#allocation11 + $0x3c] sm:$0xf]
        %v1787 = vld [vmem:[%s7] sm:$0x1]
        %v1789 = vlaneseq
        %v1790 = vshrl.u32 %v1789, 7
        %v1791 = vsub.s32 0, %v1790
        %v1792 = vrot.slane %v1787, %v1791
        %v1810 = vunpack.c.l.b16 %v1771
        %v1811 = vunpack.c.l.b16 %v1772
        %v1812 = vunpack.c.l.b16 %v1773
        %v1813 = vunpack.c.l.b16 %v1774
        %v1814 = vunpack.c.l.b16 %v1775
        %v1815 = vunpack.c.l.b16 %v1776
        %v1816 = vunpack.c.l.b16 %v1777
        %v1817 = vunpack.c.l.b16 %v1778
        %v1818 = vunpack.c.l.b16 %v1779
        %v1819 = vunpack.c.l.b16 %v1780
        %v1820 = vunpack.c.l.b16 %v1781
        %v1821 = vunpack.c.l.b16 %v1782
        %v1822 = vunpack.c.l.b16 %v1783
        %v1823 = vunpack.c.l.b16 %v1784
        %v1824 = vunpack.c.l.b16 %v1785
        %v1825 = vunpack.c.l.b16 %v1786
        %v1826 = vpack.c.b16 %v1811, %v1810
        %v1827 = vpack.c.b16 %v1813, %v1812
        %v1828 = vpack.c.b16 %v1815, %v1814
        %v1829 = vpack.c.b16 %v1817, %v1816
        %v1830 = vpack.c.b16 %v1819, %v1818
        %v1831 = vpack.c.b16 %v1821, %v1820
        %v1832 = vpack.c.b16 %v1823, %v1822
        %v1833 = vpack.c.b16 %v1825, %v1824
        %1842 = vmatprep.subr.bf16.mxu0 0
        %1843 = vmatpush1.bf16.msra.mxu0 %v1826
        %1844 = vmatprep.subr.bf16.mxu0 0
        %1845 = vmatpush1.bf16.msra.mxu0 %v1827
        %1846 = vmatprep.subr.bf16.mxu0 0
        %1847 = vmatpush1.bf16.msra.mxu0 %v1828
        %1848 = vmatprep.subr.bf16.mxu0 0
        %1849 = vmatpush1.bf16.msra.mxu0 %v1829
        %1850 = vmatprep.subr.bf16.mxu0 0
        %1851 = vmatpush1.bf16.msra.mxu0 %v1830
        %1852 = vmatprep.subr.bf16.mxu0 0
        %1853 = vmatpush1.bf16.msra.mxu0 %v1831
        %1854 = vmatprep.subr.bf16.mxu0 0
        %1855 = vmatpush1.bf16.msra.mxu0 %v1832
        %1856 = vmatprep.subr.bf16.mxu0 0
        %1857 = vmatpush1.bf16.msra.mxu0 %v1833
        %1858 = vmatprep.subr.bf16.mxu0 0
        %1859 = vmatpush1.bf16.msra.mxu0 0
        %1860 = vmatprep.subr.bf16.mxu0 0
        %1861 = vmatpush1.bf16.msra.mxu0 0
        %1862 = vmatprep.subr.bf16.mxu0 0
        %1863 = vmatpush1.bf16.msra.mxu0 0
        %1864 = vmatprep.subr.bf16.mxu0 0
        %1865 = vmatpush1.bf16.msra.mxu0 0
        %1866 = vmatprep.subr.bf16.mxu0 0
        %1867 = vmatpush1.bf16.msra.mxu0 0
        %1868 = vmatprep.subr.bf16.mxu0 0
        %1869 = vmatpush1.bf16.msra.mxu0 0
        %1870 = vmatprep.subr.bf16.mxu0 0
        %1871 = vmatpush1.bf16.msra.mxu0 0
        %1872 = vmatprep.subr.bf16.mxu0 0
        %1873 = vmatpush1.bf16.msra.mxu0 0
        %1874 = vmatprep.mubr.bf16.mxu0 0
        %1875 = vmatmul.mubr.bf16.gmra.mrb[0].mxu0 %v1769
        %v1876 = vpop.f32.mrb[0].mxu0
        %v1877 = vadd.f32 %v1792, %v1876
        %v1878 = vpop.f32.mrb[0].mxu0
        %v1879 = vpop.f32.mrb[0].mxu0
        %v1880 = vadd.f32 %v1792, %v1879
        %v1881 = vpop.f32.mrb[0].mxu0
        %1882 = vmatprep.mubr.bf16.mxu0 0
        %1883 = vmatmul.mubr.bf16.gmra.mrb[0].mxu0 %v1770
        %v1884 = vpop.f32.mrb[0].mxu0
        %v1885 = vadd.f32 %v1792, %v1884
        %v1886 = vpop.f32.mrb[0].mxu0
        %v1887 = vpop.f32.mrb[0].mxu0
        %v1888 = vadd.f32 %v1792, %v1887
        %v1889 = vpop.f32.mrb[0].mxu0
        %1890 = vdwg.mxu0
        %v1891 = vunpack.c.l.bf16 %v432
        %v1892 = vunpack.c.l.bf16 %v433
        %v1893 = vunpack.c.l.bf16 %v434
        %v1894 = vunpack.c.l.bf16 %v435
        %v1895 = vadd.f32 %v1877, %v1891
        %v1896 = vadd.f32 %v1880, %v1892
        %v1897 = vadd.f32 %v1885, %v1893
        %v1898 = vadd.f32 %v1888, %v1894
        %v1899 = vmax.f32 %v1895, 0.0
        %v1900 = vmax.f32 %v1896, 0.0
        %v1901 = vmax.f32 %v1897, 0.0
        %v1902 = vmax.f32 %v1898, 0.0
        %1903 = vst [vmem:[%s428] sm:$0xff] %v1899
        %1904 = vst [vmem:[%s428 + $0x8] sm:$0xff] %v1900
        %1905 = vst [vmem:[%s428 + $0x10] sm:$0xff] %v1901
        %1906 = vst [vmem:[%s428 + $0x18] sm:$0xff] %v1902
        %s1907 = sand.u32 %s233, 1
        %s1908 = scalar_lea.sflag [#allocation5], %s1907
        %s1909 = sand.u32 %s233, 1
        %s1910 = smul.addr %s1909, 32
        %s1911 = scalar_lea.vmem [#allocation12], %s1910
        // Predicated region
        $region73: #{tpu_custom_call.1} parent=51 // pred_check
          %p1912 = pneg %p243
        $region74: #{tpu_custom_call.1} parent=51 // pred_check_branch
          %1914 = sbr.rel (%p1912) target = $region76
        $region75: #{tpu_custom_call.1} parent=51 // pred_region
          %s1915 = smul.u32 4, %s34
          %s1917 = ssub.s32 512, 512
          %1918 = vsyncadd %s1908, %s1917
          %s1919 = smul.addr %s33, 8
          %s1920 = sadd.s32 %s1915, %s1919
          %s1921 = smul.addr %s1920, 128
          %s1922 = scalar_lea.hbm %s8, %s1921
          %s1923 = sshll.u32 %s1911, 4
          %s1924 = int_to_ptr.vmem [resolvable:$true] %s1923
          %1929 = dma.vmem_to_hbm [thread:$0]  %s1924, 512, %s1922, %s1908, 128, 128, 8
        $region76: #{tpu_custom_call.1} parent=51 // pred_fallthru
          _
      $region52: #{tpu_custom_call.1} parent=5 // pred_fallthru
        _
      %p1930 = scmp.le.s32.totalorder 2, %s24
      // Predicated region
      $region77: #{tpu_custom_call.1} parent=5 // pred_check
        %p1931 = pneg %p1930
      $region78: #{tpu_custom_call.1} parent=5 // pred_check_branch
        %1933 = sbr.rel (%p1931) target = $region80
      $region79: #{tpu_custom_call.1} parent=5 // pred_region
        %s1934 = ssub.s32 %s24, 2
        // Predicated region
        $region81: #{tpu_custom_call.1} parent=79 // pred_check
          %p1935 = pneg %p249
        $region82: #{tpu_custom_call.1} parent=79 // pred_check_branch
          %1937 = sbr.rel (%p1935) target = $region84
        $region83: #{tpu_custom_call.1} parent=79 // pred_region
          %s1938 = sand.u32 %s234, 1
          %s1939 = scalar_lea.sflag [#allocation5], %s1938
          %s1940 = sand.u32 %s234, 1
          %s1941 = smul.addr %s1940, 32
          %s1942 = scalar_lea.vmem [#allocation12], %s1941
          %1943 = dma.done %s1939, 512
        $region84: #{tpu_custom_call.1} parent=79 // pred_fallthru
          _
      $region80: #{tpu_custom_call.1} parent=5 // pred_fallthru
        _
    $region6: #{tpu_custom_call.1} parent=1 // loop_footer
      %s28 = sadd.s32 1, %s24
    $region7: #{tpu_custom_call.1} parent=1 // loop_footer_branch
      %23 = sbr.rel target = $region3
    $region8: #{tpu_custom_call.1} parent=1 // loop_exit
      _
    %1944 = vsyncpa [#allocation4], 1
    %s1945 = scalar_lea.sflag [#allocation4], 1
    %1946 = vsyncpa %s1945, 1
    %1947 = vsyncpa [#allocation7], 1
    %s1948 = scalar_lea.sflag [#allocation7], 1
    %1949 = vsyncpa %s1948, 1
    %1950 = vsyncpa [#allocation10], 1
    %1951 = vsyncpa [#allocation5], 1
    %s1952 = scalar_lea.sflag [#allocation5], 1
    %1953 = vsyncpa %s1952, 1

</llo_original>
